<compile_context>
chip_gen: v7x
topology: tpu7x:2x2x1
jax: 0.10.0
libtpu: 0.0.40
codegen_flags: <defaults>
</compile_context>

<pallas_src>
import functools

import jax
import jax.numpy as jnp
import numpy as np
from jax.experimental import pallas as pl
from jax.experimental.pallas import tpu as pltpu

LN_EPS = 1e-5
LANES = 128
VALUE_LANE = LANES - 1          # lane that carries the value-head output
MAX_BATCH_TILE = 256            # batch rows per grid step


# ----------------------------- shared math helpers ---------------------------

def _relu_squared(x):
    # x.sign() * relu(x)**2  ==  relu(x)**2
    return jnp.square(jnp.maximum(x, 0.0))


def _layernorm_nobias(x, gamma):
    mean = jnp.mean(x, axis=-1, keepdims=True)
    var = jnp.mean(jnp.square(x - mean), axis=-1, keepdims=True)
    return (x - mean) * jax.lax.rsqrt(var + LN_EPS) * gamma


# ------------------------------ parameter init -------------------------------

def _init_linear(key, din, dout):
    kw, kb = jax.random.split(key)
    bound = 1.0 / np.sqrt(din)
    w = jax.random.uniform(kw, (din, dout), jnp.float32, -bound, bound)
    b = jax.random.uniform(kb, (dout,), jnp.float32, -bound, bound)
    return w, b


def init_bro_mlp(key, dim, dim_out=None, dim_hidden=None, depth=3, expansion_factor=2):
    """Natural-shape parameters for one BroMLP (weights [din, dout], vectors 1-D)."""
    dim_out = dim_out if dim_out is not None else dim
    dim_hidden = dim_hidden if dim_hidden is not None else dim * expansion_factor
    dim_inner = dim_hidden * expansion_factor

    keys = jax.random.split(key, depth + 2)

    w_in, b_in = _init_linear(keys[0], dim, dim_hidden)
    proj_in = (w_in, b_in, jnp.ones((dim_hidden,), jnp.float32))

    blocks = []
    for i in range(depth):
        k1, k2 = jax.random.split(keys[1 + i])
        w1, b1 = _init_linear(k1, dim_hidden, dim_inner)
        g1 = jnp.ones((dim_inner,), jnp.float32)
        w2, b2 = _init_linear(k2, dim_inner, dim_hidden)
        g2 = jnp.full((dim_hidden,), 1e-5, jnp.float32)  # nn.init.constant_(layer[-1].weight, 1e-5)
        mix = jnp.ones((dim_hidden,), jnp.float32)
        blocks.append((w1, b1, g1, w2, b2, g2, mix))

    w_out, b_out = _init_linear(keys[-1], dim_hidden, dim_out)
    return {"proj_in": proj_in, "blocks": tuple(blocks), "proj_out": (w_out, b_out)}


# ------------------------------ parameter packing ----------------------------

class _SlabBuilder:
    """Packs every 2-D weight into a zero-padded [128,128] slab block (row/col
    offsets select which lanes the layer reads/writes) and every 1-D param into
    one zero-padded [n,128] vector slab."""

    def __init__(self):
        self._blocks = []
        self._rows = 0
        self._vecs = []

    def add_w(self, w, row_off=0, col=0):
        w = np.asarray(w, np.float32)
        din, dout = w.shape
        assert row_off + din <= LANES, (row_off, din)
        assert col + dout <= LANES, (col, dout)
        block = np.zeros((LANES, LANES), np.float32)
        block[row_off:row_off + din, col:col + dout] = w
        off = self._rows
        self._blocks.append(block)
        self._rows += LANES
        return off

    def add_v(self, v, col=0):
        v = np.asarray(v, np.float32).reshape(-1)
        assert col + v.size <= LANES, (col, v.size)
        row = np.zeros((LANES,), np.float32)
        row[col:col + v.size] = v
        self._vecs.append(row)
        return len(self._vecs) - 1

    def finalize(self):
        w_slab = np.concatenate(self._blocks, axis=0)
        n = len(self._vecs)
        n_pad = max(8, ((n + 7) // 8) * 8)          # multiple-of-8 sublanes
        v_slab = np.zeros((n_pad, LANES), np.float32)
        v_slab[:n] = np.stack(self._vecs)
        return jnp.asarray(w_slab), jnp.asarray(v_slab)


def pack_actor(net_p, act_p, val_p, num_actions):
    """Pack trunk + both heads into (w_slab, v_slab) and a static index plan."""
    sb = _SlabBuilder()

    def pack_blocks_and_out(p, lane_off, out_col):
        blocks = []
        for (w1, b1, g1, w2, b2, g2, mix) in p["blocks"]:
            di = int(np.asarray(w1).shape[1])
            dh = int(np.asarray(w2).shape[1])
            blocks.append((
                sb.add_w(w1, row_off=lane_off, col=0),   # read lanes [lane_off, lane_off+dh)
                sb.add_v(b1, col=0),
                sb.add_v(g1, col=0),
                di,                                      # LN divisor (inner)
                sb.add_w(w2, row_off=0, col=lane_off),   # write lanes [lane_off, lane_off+dh)
                sb.add_v(b2, col=lane_off),
                sb.add_v(g2, col=lane_off),
                dh,                                      # LN divisor (hidden)
                sb.add_v(mix, col=lane_off),
            ))
        w_o, b_o = p["proj_out"]
        proj_out = (sb.add_w(w_o, row_off=lane_off, col=out_col),
                    sb.add_v(b_o, col=out_col))
        return {"blocks": tuple(blocks), "proj_out": proj_out}

    # ---- trunk (lives in lanes starting at 0) ----
    w_i, b_i, g_i = net_p["proj_in"]
    dh_net = int(np.asarray(w_i).shape[1])
    net_plan = {"proj_in": (sb.add_w(w_i), sb.add_v(b_i), sb.add_v(g_i), dh_net)}
    net_plan.update(pack_blocks_and_out(net_p, lane_off=0, out_col=0))

    # ---- fused action/value proj_in: concat along the output (lane) axis ----
    wa, ba, ga = act_p["proj_in"]
    wv, bv, gv = val_p["proj_in"]
    hh = int(np.asarray(wa).shape[1])
    assert int(np.asarray(wv).shape[1]) == hh and 2 * hh <= LANES
    w_fused = np.concatenate([np.asarray(wa, np.float32), np.asarray(wv, np.float32)], axis=1)
    b_fused = np.concatenate([np.asarray(ba, np.float32), np.asarray(bv, np.float32)], axis=0)
    heads_proj_in = (sb.add_w(w_fused), sb.add_v(b_fused),
                     sb.add_v(ga, col=0), sb.add_v(gv, col=hh))

    # action head lives in lanes [0, hh); value head in lanes [hh, 2*hh)
    act_plan = pack_blocks_and_out(act_p, lane_off=0, out_col=0)
    val_plan = pack_blocks_and_out(val_p, lane_off=hh, out_col=VALUE_LANE)

    assert num_actions < VALUE_LANE

    w_slab, v_slab = sb.finalize()
    plan = {"net": net_plan, "heads_proj_in": heads_proj_in,
            "action": act_plan, "value": val_plan,
            "head_hidden": hh, "num_actions": int(num_actions),
            "value_lane": VALUE_LANE}
    return w_slab, v_slab, plan


# --------------------------- stride-0 broadcast probe -------------------------

def _probe_stride0_broadcast():
    """Check that a stride-0 sublane-broadcast load lowers and is correct."""
    def k(v_ref, o_ref):
        o_ref[...] = v_ref[pl.ds(2, 8, stride=0)]
    try:
        f = pl.pallas_call(
            k,
            out_shape=jax.ShapeDtypeStruct((8, LANES), jnp.float32),
            in_specs=[pl.BlockSpec(memory_space=pltpu.MemorySpace.VMEM)],
            out_specs=pl.BlockSpec(memory_space=pltpu.MemorySpace.VMEM),
        )
        src = np.arange(16 * LANES, dtype=np.float32).reshape(16, LANES)
        res = np.asarray(jax.block_until_ready(f(jnp.asarray(src))))
        return bool(np.allclose(res, np.broadcast_to(src[2], (8, LANES))))
    except Exception:
        return False


# --------------------------------- fused kernel ------------------------------

def _make_actor_kernel(plan, block_b, use_stride0):
    hh = plan["head_hidden"]
    num_actions = plan["num_actions"]
    value_lane = plan["value_lane"]

    def kernel(x_ref, w_ref, v_ref, out_ref):
        def vec(idx):
            if use_stride0:
                # stride-0 sublane broadcast: arrives pre-broadcast as [B, 128]
                return v_ref[pl.ds(idx, block_b, stride=0)]
            return v_ref[idx:idx + 1, :]          # [1,128], jnp-broadcast against [B,128]

        def W(off):                               # full lane-dense [128, 128] block
            return w_ref[off:off + LANES, :]

        def linear(h, w_off, b_idx):
            return jnp.dot(h, W(w_off), preferred_element_type=jnp.float32) + vec(b_idx)

        def layernorm(x, g_idx, n_valid, mask=None):
            # lane-dense LN: pads are zero (or masked to zero), so sum/n_valid
            # gives the stats of the valid lanes; gamma pads keep pads at zero.
            if mask is not None:
                x = jnp.where(mask, x, 0.0)
            inv = np.float32(1.0 / n_valid)
            mean = jnp.sum(x, axis=-1, keepdims=True) * inv
            msq = jnp.sum(x * x, axis=-1, keepdims=True) * inv
            var = msq - mean * mean
            return (x - mean) * jax.lax.rsqrt(var + LN_EPS) * vec(g_idx)

        def blocks_and_proj_out(h, p):
            for (w1, b1, g1, n1, w2, b2, g2, n2, mix) in p["blocks"]:
                y = layernorm(_relu_squared(linear(h, w1, b1)), g1, n1)
                y = layernorm(linear(y, w2, b2), g2, n2)
                h = h * vec(mix) + y
            w_o, b_o = p["proj_out"]
            return linear(h, w_o, b_o)

        lane = jax.lax.broadcasted_iota(jnp.int32, (block_b, LANES), 1)

        x = x_ref[...]                                       # [B, 128] (lane-padded state)

        # ---- trunk (net) ----
        net = plan["net"]
        w_i, b_i, g_i, n_i = net["proj_in"]
        h = layernorm(_relu_squared(linear(x, w_i, b_i)), g_i, n_i)
        hidden = blocks_and_proj_out(h, net)                 # [B,128], valid lanes [0, hidden_dim)

        # ---- fused action/value proj_in (one matmul for both heads) ----
        w_f, b_f, g_a, g_v = plan["heads_proj_in"]
        z = _relu_squared(linear(hidden, w_f, b_f))          # action in [0,hh), value in [hh,2hh)
        h_act = layernorm(z, g_a, hh, mask=lane < hh)
        h_val = layernorm(z, g_v, hh, mask=(lane >= hh) & (lane < 2 * hh))

        logits = blocks_and_proj_out(h_act, plan["action"])  # valid lanes [0, num_actions)
        value = blocks_and_proj_out(h_val, plan["value"])    # valid lane: value_lane only

        # masked softmax over the action lanes; exact division so probs sum to 1
        act_mask = lane < num_actions
        ml = jnp.where(act_mask, logits, -1e30)
        m = jnp.max(ml, axis=-1, keepdims=True)
        e = jnp.exp(ml - m)                                  # masked lanes underflow to 0
        probs = e / jnp.sum(e, axis=-1, keepdims=True)

        # lane-dense merged output: probs in lanes [0,num_actions), value in lane 127
        out_ref[...] = probs + value

    return kernel


def _actor_forward(x, w_slab, v_slab, *, plan, use_stride0):
    batch, state_dim = x.shape
    num_actions = plan["num_actions"]
    value_lane = plan["value_lane"]

    pad_b = max(8, ((batch + 7) // 8) * 8)               # fill the sublane tile
    tb = min(pad_b, MAX_BATCH_TILE)
    pad_b = ((pad_b + tb - 1) // tb) * tb                # multiple of the batch tile
    grid = (pad_b // tb,)

    # lane-pad the state so every load / matmul input is a full 128-lane tile
    xp = jnp.pad(x, ((0, pad_b - batch), (0, LANES - state_dim)))

    kernel = _make_actor_kernel(plan, tb, use_stride0)
    out = pl.pallas_call(
        kernel,
        out_shape=jax.ShapeDtypeStruct((pad_b, LANES), jnp.float32),
        grid=grid,
        in_specs=[
            pl.BlockSpec((tb, LANES), lambda i: (i, 0)),          # x tile (pipelined)
            pl.BlockSpec(w_slab.shape, lambda i: (0, 0)),         # weight slab, resident
            pl.BlockSpec(v_slab.shape, lambda i: (0, 0)),         # vector slab, resident
        ],
        out_specs=pl.BlockSpec((tb, LANES), lambda i: (i, 0)),
        compiler_params=pltpu.CompilerParams(
            dimension_semantics=("parallel",)),                   # megacore on v7x
        # TODO(synk): set vmem_limit_bytes explicitly if hidden_dim/batch scale
        # the slab + activations toward the 32 MiB default scoped limit.
    )(xp, w_slab, v_slab)

    probs = out[:batch, :num_actions]
    value = out[:batch, value_lane:value_lane + 1]
    return probs, value


# ----------------------------------- Actor -----------------------------------

class ActorPallas:
    def __init__(self, key, state_dim, hidden_dim, num_actions, mlp_depth=2):
        k_net, k_act, k_val = jax.random.split(key, 3)
        self.net_params = init_bro_mlp(
            k_net, state_dim, dim_out=hidden_dim, dim_hidden=hidden_dim * 2, depth=mlp_depth)
        self.action_params = init_bro_mlp(k_act, hidden_dim, dim_out=num_actions, depth=1)
        self.value_params = init_bro_mlp(k_val, hidden_dim, dim_out=1, depth=2)

        self.w_slab, self.v_slab, plan = pack_actor(
            self.net_params, self.action_params, self.value_params, num_actions)
        use_stride0 = _probe_stride0_broadcast()
        self._forward = jax.jit(functools.partial(
            _actor_forward, plan=plan, use_stride0=use_stride0))

    def __call__(self, x):
        return self._forward(x, self.w_slab, self.v_slab)


# ------------------------------ pure-JAX reference ---------------------------

def _bro_mlp_ref(x, p):
    w, b, g = p["proj_in"]
    h = _layernorm_nobias(_relu_squared(x @ w + b), g)
    for (w1, b1, g1, w2, b2, g2, mix) in p["blocks"]:
        y = _layernorm_nobias(_relu_squared(h @ w1 + b1), g1)
        y = _layernorm_nobias(y @ w2 + b2, g2)
        h = h * mix + y
    w, b = p["proj_out"]
    return h @ w + b


# ------------------------------------ main ------------------------------------

if __name__ == "__main__":
    key = jax.random.PRNGKey(0)
    k_params, k_x = jax.random.split(key)

    batch, state_dim, hidden_dim, num_actions = 4, 16, 32, 6

    actor = ActorPallas(k_params, state_dim, hidden_dim, num_actions, mlp_depth=2)
    x = jax.random.normal(k_x, (batch, state_dim), jnp.float32)

    action_probs, value = actor(x)
    jax.block_until_ready((action_probs, value))

    # sanity-check against a pure-JAX reference built from the unpacked params
    hidden_ref = _bro_mlp_ref(x, actor.net_params)
    probs_ref = jax.nn.softmax(_bro_mlp_ref(hidden_ref, actor.action_params), axis=-1)
    value_ref = _bro_mlp_ref(hidden_ref, actor.value_params)

    np.testing.assert_allclose(np.asarray(action_probs), np.asarray(probs_ref),
                               rtol=1e-2, atol=1e-4)
    np.testing.assert_allclose(np.asarray(value), np.asarray(value_ref),
                               rtol=1e-2, atol=1e-4)
    assert action_probs.shape == (batch, num_actions)
    assert value.shape == (batch, 1)
    np.testing.assert_allclose(np.asarray(action_probs).sum(-1), np.ones(batch), atol=1e-4)

    print("KERNEL_OK")
</pallas_src>

<mosaic_0001>
module attributes {stable_mosaic.version = 11 : i64} {
  func.func @k(%arg0: memref<16x128xf32, #tpu.memory_space<vmem>>, %arg1: memref<8x128xf32, #tpu.memory_space<vmem>>) attributes {dimension_semantics = [], scalar_prefetch = 0 : i64, scratch_operands = 0 : i64, tpu.core_type = #tpu.core_type<tc>} {
    %c2 = arith.constant 2 : index
    %c0 = arith.constant 0 : index
    %0 = tpu.strided_load %arg0[%c2, %c0] {strides = array<i32: 0, 1>} : memref<16x128xf32, #tpu.memory_space<vmem>>, vector<8x128xf32>
    %c0_0 = arith.constant 0 : index
    %c0_1 = arith.constant 0 : index
    %1 = vector.load %arg1[%c0_0, %c0_1] : memref<8x128xf32, #tpu.memory_space<vmem>>, vector<8x128xf32>
    tpu.vector_store %arg1[%c0_0, %c0_1], %0 {strides = array<i32>} : memref<8x128xf32, #tpu.memory_space<vmem>>, vector<8x128xf32>,
    return
  }
}

module attributes {stable_mosaic.version = 11 : i64} {
  func.func @kernel(%arg0: i32, %arg1: memref<8x128xf32, #tpu.memory_space<vmem>>, %arg2: memref<1920x128xf32, #tpu.memory_space<vmem>>, %arg3: memref<40x128xf32, #tpu.memory_space<vmem>>, %arg4: memref<8x128xf32, #tpu.memory_space<vmem>>) attributes {dimension_semantics = [#tpu.dimension_semantics<parallel>], iteration_bounds = array<i64: 1>, scalar_prefetch = 0 : i64, scratch_operands = 0 : i64, tpu.core_type = #tpu.core_type<tc>, window_params = [{transform_indices = @transform_0, window_bounds = array<i64: 8, 128>}, {pipeline_mode = #tpu.pipeline_mode<synchronous>, transform_indices = @transform_1, window_bounds = array<i64: 1920, 128>}, {pipeline_mode = #tpu.pipeline_mode<synchronous>, transform_indices = @transform_2, window_bounds = array<i64: 40, 128>}, {transform_indices = @transform_3, window_bounds = array<i64: 8, 128>}]} {
    %0 = tpu.iota {dimensions = array<i32: 1>} : vector<8x128xi32>
    %c0 = arith.constant 0 : index
    %c0_0 = arith.constant 0 : index
    %1 = vector.load %arg1[%c0, %c0_0] : memref<8x128xf32, #tpu.memory_space<vmem>>, vector<8x128xf32>
    %c0_1 = arith.constant 0 : index
    %c0_2 = arith.constant 0 : index
    %2 = vector.load %arg2[%c0_1, %c0_2] : memref<1920x128xf32, #tpu.memory_space<vmem>>, vector<128x128xf32>
    %cst = arith.constant dense<0.000000e+00> : vector<8x128xf32>
    %3 = tpu.matmul %1, %2, %cst {dimension_numbers = #tpu.dot_dimension_numbers<[1], [0], [0], [1], [0, 0, 1, 1], [], []>} : vector<8x128xf32>, vector<128x128xf32>, vector<8x128xf32> -> vector<8x128xf32>
    %c0_3 = arith.constant 0 : index
    %c0_4 = arith.constant 0 : index
    %4 = vector.load %arg3[%c0_3, %c0_4] : memref<40x128xf32, #tpu.memory_space<vmem>>, vector<1x128xf32>
    %5 = vector.broadcast %4 : vector<1x128xf32> to vector<8x128xf32>
    %6 = arith.addf %3, %5 : vector<8x128xf32>
    %cst_5 = arith.constant 0.000000e+00 : f32
    %7 = vector.broadcast %cst_5 : f32 to vector<8x128xf32>
    %8 = arith.maximumf %6, %7 : vector<8x128xf32>
    %9 = arith.mulf %8, %8 : vector<8x128xf32>
    %cst_6 = arith.constant dense<0.000000e+00> : vector<8xf32>
    %10 = vector.multi_reduction <add>, %9, %cst_6 [1] : vector<8x128xf32> to vector<8xf32>
    %11 = vector.shape_cast %10 : vector<8xf32> to vector<8x1xf32>
    %cst_7 = arith.constant 1.562500e-02 : f32
    %12 = vector.broadcast %cst_7 : f32 to vector<8x1xf32>
    %13 = arith.mulf %11, %12 : vector<8x1xf32>
    %14 = arith.mulf %9, %9 : vector<8x128xf32>
    %cst_8 = arith.constant dense<0.000000e+00> : vector<8xf32>
    %15 = vector.multi_reduction <add>, %14, %cst_8 [1] : vector<8x128xf32> to vector<8xf32>
    %16 = vector.shape_cast %15 : vector<8xf32> to vector<8x1xf32>
    %cst_9 = arith.constant 1.562500e-02 : f32
    %17 = vector.broadcast %cst_9 : f32 to vector<8x1xf32>
    %18 = arith.mulf %16, %17 : vector<8x1xf32>
    %19 = arith.mulf %13, %13 : vector<8x1xf32>
    %20 = arith.subf %18, %19 : vector<8x1xf32>
    %21 = vector.broadcast %13 : vector<8x1xf32> to vector<8x128xf32>
    %22 = arith.subf %9, %21 : vector<8x128xf32>
    %cst_10 = arith.constant 9.99999974E-6 : f32
    %23 = vector.broadcast %cst_10 : f32 to vector<8x1xf32>
    %24 = arith.addf %20, %23 : vector<8x1xf32>
    %25 = math.rsqrt %24 : vector<8x1xf32>
    %26 = vector.broadcast %25 : vector<8x1xf32> to vector<8x128xf32>
    %27 = arith.mulf %22, %26 : vector<8x128xf32>
    %c1 = arith.constant 1 : index
    %c0_11 = arith.constant 0 : index
    %28 = vector.load %arg3[%c1, %c0_11] : memref<40x128xf32, #tpu.memory_space<vmem>>, vector<1x128xf32>
    %29 = vector.broadcast %28 : vector<1x128xf32> to vector<8x128xf32>
    %30 = arith.mulf %27, %29 : vector<8x128xf32>
    %c128 = arith.constant 128 : index
    %c0_12 = arith.constant 0 : index
    %31 = vector.load %arg2[%c128, %c0_12] : memref<1920x128xf32, #tpu.memory_space<vmem>>, vector<128x128xf32>
    %cst_13 = arith.constant dense<0.000000e+00> : vector<8x128xf32>
    %32 = tpu.matmul %30, %31, %cst_13 {dimension_numbers = #tpu.dot_dimension_numbers<[1], [0], [0], [1], [0, 0, 1, 1], [], []>} : vector<8x128xf32>, vector<128x128xf32>, vector<8x128xf32> -> vector<8x128xf32>
    %c2 = arith.constant 2 : index
    %c0_14 = arith.constant 0 : index
    %33 = vector.load %arg3[%c2, %c0_14] : memref<40x128xf32, #tpu.memory_space<vmem>>, vector<1x128xf32>
    %34 = vector.broadcast %33 : vector<1x128xf32> to vector<8x128xf32>
    %35 = arith.addf %32, %34 : vector<8x128xf32>
    %cst_15 = arith.constant 0.000000e+00 : f32
    %36 = vector.broadcast %cst_15 : f32 to vector<8x128xf32>
    %37 = arith.maximumf %35, %36 : vector<8x128xf32>
    %38 = arith.mulf %37, %37 : vector<8x128xf32>
    %cst_16 = arith.constant dense<0.000000e+00> : vector<8xf32>
    %39 = vector.multi_reduction <add>, %38, %cst_16 [1] : vector<8x128xf32> to vector<8xf32>
    %40 = vector.shape_cast %39 : vector<8xf32> to vector<8x1xf32>
    %cst_17 = arith.constant 7.812500e-03 : f32
    %41 = vector.broadcast %cst_17 : f32 to vector<8x1xf32>
    %42 = arith.mulf %40, %41 : vector<8x1xf32>
    %43 = arith.mulf %38, %38 : vector<8x128xf32>
    %cst_18 = arith.constant dense<0.000000e+00> : vector<8xf32>
    %44 = vector.multi_reduction <add>, %43, %cst_18 [1] : vector<8x128xf32> to vector<8xf32>
    %45 = vector.shape_cast %44 : vector<8xf32> to vector<8x1xf32>
    %cst_19 = arith.constant 7.812500e-03 : f32
    %46 = vector.broadcast %cst_19 : f32 to vector<8x1xf32>
    %47 = arith.mulf %45, %46 : vector<8x1xf32>
    %48 = arith.mulf %42, %42 : vector<8x1xf32>
    %49 = arith.subf %47, %48 : vector<8x1xf32>
    %50 = vector.broadcast %42 : vector<8x1xf32> to vector<8x128xf32>
    %51 = arith.subf %38, %50 : vector<8x128xf32>
    %cst_20 = arith.constant 9.99999974E-6 : f32
    %52 = vector.broadcast %cst_20 : f32 to vector<8x1xf32>
    %53 = arith.addf %49, %52 : vector<8x1xf32>
    %54 = math.rsqrt %53 : vector<8x1xf32>
    %55 = vector.broadcast %54 : vector<8x1xf32> to vector<8x128xf32>
    %56 = arith.mulf %51, %55 : vector<8x128xf32>
    %c3 = arith.constant 3 : index
    %c0_21 = arith.constant 0 : index
    %57 = vector.load %arg3[%c3, %c0_21] : memref<40x128xf32, #tpu.memory_space<vmem>>, vector<1x128xf32>
    %58 = vector.broadcast %57 : vector<1x128xf32> to vector<8x128xf32>
    %59 = arith.mulf %56, %58 : vector<8x128xf32>
    %c256 = arith.constant 256 : index
    %c0_22 = arith.constant 0 : index
    %60 = vector.load %arg2[%c256, %c0_22] : memref<1920x128xf32, #tpu.memory_space<vmem>>, vector<128x128xf32>
    %cst_23 = arith.constant dense<0.000000e+00> : vector<8x128xf32>
    %61 = tpu.matmul %59, %60, %cst_23 {dimension_numbers = #tpu.dot_dimension_numbers<[1], [0], [0], [1], [0, 0, 1, 1], [], []>} : vector<8x128xf32>, vector<128x128xf32>, vector<8x128xf32> -> vector<8x128xf32>
    %c4 = arith.constant 4 : index
    %c0_24 = arith.constant 0 : index
    %62 = vector.load %arg3[%c4, %c0_24] : memref<40x128xf32, #tpu.memory_space<vmem>>, vector<1x128xf32>
    %63 = vector.broadcast %62 : vector<1x128xf32> to vector<8x128xf32>
    %64 = arith.addf %61, %63 : vector<8x128xf32>
    %cst_25 = arith.constant dense<0.000000e+00> : vector<8xf32>
    %65 = vector.multi_reduction <add>, %64, %cst_25 [1] : vector<8x128xf32> to vector<8xf32>
    %66 = vector.shape_cast %65 : vector<8xf32> to vector<8x1xf32>
    %cst_26 = arith.constant 1.562500e-02 : f32
    %67 = vector.broadcast %cst_26 : f32 to vector<8x1xf32>
    %68 = arith.mulf %66, %67 : vector<8x1xf32>
    %69 = arith.mulf %64, %64 : vector<8x128xf32>
    %cst_27 = arith.constant dense<0.000000e+00> : vector<8xf32>
    %70 = vector.multi_reduction <add>, %69, %cst_27 [1] : vector<8x128xf32> to vector<8xf32>
    %71 = vector.shape_cast %70 : vector<8xf32> to vector<8x1xf32>
    %cst_28 = arith.constant 1.562500e-02 : f32
    %72 = vector.broadcast %cst_28 : f32 to vector<8x1xf32>
    %73 = arith.mulf %71, %72 : vector<8x1xf32>
    %74 = arith.mulf %68, %68 : vector<8x1xf32>
    %75 = arith.subf %73, %74 : vector<8x1xf32>
    %76 = vector.broadcast %68 : vector<8x1xf32> to vector<8x128xf32>
    %77 = arith.subf %64, %76 : vector<8x128xf32>
    %cst_29 = arith.constant 9.99999974E-6 : f32
    %78 = vector.broadcast %cst_29 : f32 to vector<8x1xf32>
    %79 = arith.addf %75, %78 : vector<8x1xf32>
    %80 = math.rsqrt %79 : vector<8x1xf32>
    %81 = vector.broadcast %80 : vector<8x1xf32> to vector<8x128xf32>
    %82 = arith.mulf %77, %81 : vector<8x128xf32>
    %c5 = arith.constant 5 : index
    %c0_30 = arith.constant 0 : index
    %83 = vector.load %arg3[%c5, %c0_30] : memref<40x128xf32, #tpu.memory_space<vmem>>, vector<1x128xf32>
    %84 = vector.broadcast %83 : vector<1x128xf32> to vector<8x128xf32>
    %85 = arith.mulf %82, %84 : vector<8x128xf32>
    %c6 = arith.constant 6 : index
    %c0_31 = arith.constant 0 : index
    %86 = vector.load %arg3[%c6, %c0_31] : memref<40x128xf32, #tpu.memory_space<vmem>>, vector<1x128xf32>
    %87 = vector.broadcast %86 : vector<1x128xf32> to vector<8x128xf32>
    %88 = arith.mulf %30, %87 : vector<8x128xf32>
    %89 = arith.addf %88, %85 : vector<8x128xf32>
    %c384 = arith.constant 384 : index
    %c0_32 = arith.constant 0 : index
    %90 = vector.load %arg2[%c384, %c0_32] : memref<1920x128xf32, #tpu.memory_space<vmem>>, vector<128x128xf32>
    %cst_33 = arith.constant dense<0.000000e+00> : vector<8x128xf32>
    %91 = tpu.matmul %89, %90, %cst_33 {dimension_numbers = #tpu.dot_dimension_numbers<[1], [0], [0], [1], [0, 0, 1, 1], [], []>} : vector<8x128xf32>, vector<128x128xf32>, vector<8x128xf32> -> vector<8x128xf32>
    %c7 = arith.constant 7 : index
    %c0_34 = arith.constant 0 : index
    %92 = vector.load %arg3[%c7, %c0_34] : memref<40x128xf32, #tpu.memory_space<vmem>>, vector<1x128xf32>
    %93 = vector.broadcast %92 : vector<1x128xf32> to vector<8x128xf32>
    %94 = arith.addf %91, %93 : vector<8x128xf32>
    %cst_35 = arith.constant 0.000000e+00 : f32
    %95 = vector.broadcast %cst_35 : f32 to vector<8x128xf32>
    %96 = arith.maximumf %94, %95 : vector<8x128xf32>
    %97 = arith.mulf %96, %96 : vector<8x128xf32>
    %cst_36 = arith.constant dense<0.000000e+00> : vector<8xf32>
    %98 = vector.multi_reduction <add>, %97, %cst_36 [1] : vector<8x128xf32> to vector<8xf32>
    %99 = vector.shape_cast %98 : vector<8xf32> to vector<8x1xf32>
    %cst_37 = arith.constant 7.812500e-03 : f32
    %100 = vector.broadcast %cst_37 : f32 to vector<8x1xf32>
    %101 = arith.mulf %99, %100 : vector<8x1xf32>
    %102 = arith.mulf %97, %97 : vector<8x128xf32>
    %cst_38 = arith.constant dense<0.000000e+00> : vector<8xf32>
    %103 = vector.multi_reduction <add>, %102, %cst_38 [1] : vector<8x128xf32> to vector<8xf32>
    %104 = vector.shape_cast %103 : vector<8xf32> to vector<8x1xf32>
    %cst_39 = arith.constant 7.812500e-03 : f32
    %105 = vector.broadcast %cst_39 : f32 to vector<8x1xf32>
    %106 = arith.mulf %104, %105 : vector<8x1xf32>
    %107 = arith.mulf %101, %101 : vector<8x1xf32>
    %108 = arith.subf %106, %107 : vector<8x1xf32>
    %109 = vector.broadcast %101 : vector<8x1xf32> to vector<8x128xf32>
    %110 = arith.subf %97, %109 : vector<8x128xf32>
    %cst_40 = arith.constant 9.99999974E-6 : f32
    %111 = vector.broadcast %cst_40 : f32 to vector<8x1xf32>
    %112 = arith.addf %108, %111 : vector<8x1xf32>
    %113 = math.rsqrt %112 : vector<8x1xf32>
    %114 = vector.broadcast %113 : vector<8x1xf32> to vector<8x128xf32>
    %115 = arith.mulf %110, %114 : vector<8x128xf32>
    %c8 = arith.constant 8 : index
    %c0_41 = arith.constant 0 : index
    %116 = vector.load %arg3[%c8, %c0_41] : memref<40x128xf32, #tpu.memory_space<vmem>>, vector<1x128xf32>
    %117 = vector.broadcast %116 : vector<1x128xf32> to vector<8x128xf32>
    %118 = arith.mulf %115, %117 : vector<8x128xf32>
    %c512 = arith.constant 512 : index
    %c0_42 = arith.constant 0 : index
    %119 = vector.load %arg2[%c512, %c0_42] : memref<1920x128xf32, #tpu.memory_space<vmem>>, vector<128x128xf32>
    %cst_43 = arith.constant dense<0.000000e+00> : vector<8x128xf32>
    %120 = tpu.matmul %118, %119, %cst_43 {dimension_numbers = #tpu.dot_dimension_numbers<[1], [0], [0], [1], [0, 0, 1, 1], [], []>} : vector<8x128xf32>, vector<128x128xf32>, vector<8x128xf32> -> vector<8x128xf32>
    %c9 = arith.constant 9 : index
    %c0_44 = arith.constant 0 : index
    %121 = vector.load %arg3[%c9, %c0_44] : memref<40x128xf32, #tpu.memory_space<vmem>>, vector<1x128xf32>
    %122 = vector.broadcast %121 : vector<1x128xf32> to vector<8x128xf32>
    %123 = arith.addf %120, %122 : vector<8x128xf32>
    %cst_45 = arith.constant dense<0.000000e+00> : vector<8xf32>
    %124 = vector.multi_reduction <add>, %123, %cst_45 [1] : vector<8x128xf32> to vector<8xf32>
    %125 = vector.shape_cast %124 : vector<8xf32> to vector<8x1xf32>
    %cst_46 = arith.constant 1.562500e-02 : f32
    %126 = vector.broadcast %cst_46 : f32 to vector<8x1xf32>
    %127 = arith.mulf %125, %126 : vector<8x1xf32>
    %128 = arith.mulf %123, %123 : vector<8x128xf32>
    %cst_47 = arith.constant dense<0.000000e+00> : vector<8xf32>
    %129 = vector.multi_reduction <add>, %128, %cst_47 [1] : vector<8x128xf32> to vector<8xf32>
    %130 = vector.shape_cast %129 : vector<8xf32> to vector<8x1xf32>
    %cst_48 = arith.constant 1.562500e-02 : f32
    %131 = vector.broadcast %cst_48 : f32 to vector<8x1xf32>
    %132 = arith.mulf %130, %131 : vector<8x1xf32>
    %133 = arith.mulf %127, %127 : vector<8x1xf32>
    %134 = arith.subf %132, %133 : vector<8x1xf32>
    %135 = vector.broadcast %127 : vector<8x1xf32> to vector<8x128xf32>
    %136 = arith.subf %123, %135 : vector<8x128xf32>
    %cst_49 = arith.constant 9.99999974E-6 : f32
    %137 = vector.broadcast %cst_49 : f32 to vector<8x1xf32>
    %138 = arith.addf %134, %137 : vector<8x1xf32>
    %139 = math.rsqrt %138 : vector<8x1xf32>
    %140 = vector.broadcast %139 : vector<8x1xf32> to vector<8x128xf32>
    %141 = arith.mulf %136, %140 : vector<8x128xf32>
    %c10 = arith.constant 10 : index
    %c0_50 = arith.constant 0 : index
    %142 = vector.load %arg3[%c10, %c0_50] : memref<40x128xf32, #tpu.memory_space<vmem>>, vector<1x128xf32>
    %143 = vector.broadcast %142 : vector<1x128xf32> to vector<8x128xf32>
    %144 = arith.mulf %141, %143 : vector<8x128xf32>
    %c11 = arith.constant 11 : index
    %c0_51 = arith.constant 0 : index
    %145 = vector.load %arg3[%c11, %c0_51] : memref<40x128xf32, #tpu.memory_space<vmem>>, vector<1x128xf32>
    %146 = vector.broadcast %145 : vector<1x128xf32> to vector<8x128xf32>
    %147 = arith.mulf %89, %146 : vector<8x128xf32>
    %148 = arith.addf %147, %144 : vector<8x128xf32>
    %c640 = arith.constant 640 : index
    %c0_52 = arith.constant 0 : index
    %149 = vector.load %arg2[%c640, %c0_52] : memref<1920x128xf32, #tpu.memory_space<vmem>>, vector<128x128xf32>
    %cst_53 = arith.constant dense<0.000000e+00> : vector<8x128xf32>
    %150 = tpu.matmul %148, %149, %cst_53 {dimension_numbers = #tpu.dot_dimension_numbers<[1], [0], [0], [1], [0, 0, 1, 1], [], []>} : vector<8x128xf32>, vector<128x128xf32>, vector<8x128xf32> -> vector<8x128xf32>
    %c12 = arith.constant 12 : index
    %c0_54 = arith.constant 0 : index
    %151 = vector.load %arg3[%c12, %c0_54] : memref<40x128xf32, #tpu.memory_space<vmem>>, vector<1x128xf32>
    %152 = vector.broadcast %151 : vector<1x128xf32> to vector<8x128xf32>
    %153 = arith.addf %150, %152 : vector<8x128xf32>
    %c768 = arith.constant 768 : index
    %c0_55 = arith.constant 0 : index
    %154 = vector.load %arg2[%c768, %c0_55] : memref<1920x128xf32, #tpu.memory_space<vmem>>, vector<128x128xf32>
    %cst_56 = arith.constant dense<0.000000e+00> : vector<8x128xf32>
    %155 = tpu.matmul %153, %154, %cst_56 {dimension_numbers = #tpu.dot_dimension_numbers<[1], [0], [0], [1], [0, 0, 1, 1], [], []>} : vector<8x128xf32>, vector<128x128xf32>, vector<8x128xf32> -> vector<8x128xf32>
    %c13 = arith.constant 13 : index
    %c0_57 = arith.constant 0 : index
    %156 = vector.load %arg3[%c13, %c0_57] : memref<40x128xf32, #tpu.memory_space<vmem>>, vector<1x128xf32>
    %157 = vector.broadcast %156 : vector<1x128xf32> to vector<8x128xf32>
    %158 = arith.addf %155, %157 : vector<8x128xf32>
    %cst_58 = arith.constant 0.000000e+00 : f32
    %159 = vector.broadcast %cst_58 : f32 to vector<8x128xf32>
    %160 = arith.maximumf %158, %159 : vector<8x128xf32>
    %161 = arith.mulf %160, %160 : vector<8x128xf32>
    %c64_i32 = arith.constant 64 : i32
    %162 = vector.broadcast %c64_i32 : i32 to vector<8x128xi32>
    %163 = arith.cmpi slt, %0, %162 : vector<8x128xi32>
    %cst_59 = arith.constant 0.000000e+00 : f32
    %164 = vector.broadcast %cst_59 : f32 to vector<8x128xf32>
    %165 = arith.select %163, %161, %164 : vector<8x128xi1>, vector<8x128xf32>
    %cst_60 = arith.constant dense<0.000000e+00> : vector<8xf32>
    %166 = vector.multi_reduction <add>, %165, %cst_60 [1] : vector<8x128xf32> to vector<8xf32>
    %167 = vector.shape_cast %166 : vector<8xf32> to vector<8x1xf32>
    %cst_61 = arith.constant 1.562500e-02 : f32
    %168 = vector.broadcast %cst_61 : f32 to vector<8x1xf32>
    %169 = arith.mulf %167, %168 : vector<8x1xf32>
    %170 = arith.mulf %165, %165 : vector<8x128xf32>
    %cst_62 = arith.constant dense<0.000000e+00> : vector<8xf32>
    %171 = vector.multi_reduction <add>, %170, %cst_62 [1] : vector<8x128xf32> to vector<8xf32>
    %172 = vector.shape_cast %171 : vector<8xf32> to vector<8x1xf32>
    %cst_63 = arith.constant 1.562500e-02 : f32
    %173 = vector.broadcast %cst_63 : f32 to vector<8x1xf32>
    %174 = arith.mulf %172, %173 : vector<8x1xf32>
    %175 = arith.mulf %169, %169 : vector<8x1xf32>
    %176 = arith.subf %174, %175 : vector<8x1xf32>
    %177 = vector.broadcast %169 : vector<8x1xf32> to vector<8x128xf32>
    %178 = arith.subf %165, %177 : vector<8x128xf32>
    %cst_64 = arith.constant 9.99999974E-6 : f32
    %179 = vector.broadcast %cst_64 : f32 to vector<8x1xf32>
    %180 = arith.addf %176, %179 : vector<8x1xf32>
    %181 = math.rsqrt %180 : vector<8x1xf32>
    %182 = vector.broadcast %181 : vector<8x1xf32> to vector<8x128xf32>
    %183 = arith.mulf %178, %182 : vector<8x128xf32>
    %c14 = arith.constant 14 : index
    %c0_65 = arith.constant 0 : index
    %184 = vector.load %arg3[%c14, %c0_65] : memref<40x128xf32, #tpu.memory_space<vmem>>, vector<1x128xf32>
    %185 = vector.broadcast %184 : vector<1x128xf32> to vector<8x128xf32>
    %186 = arith.mulf %183, %185 : vector<8x128xf32>
    %c64_i32_66 = arith.constant 64 : i32
    %187 = vector.broadcast %c64_i32_66 : i32 to vector<8x128xi32>
    %188 = arith.cmpi sge, %0, %187 : vector<8x128xi32>
    %c128_i32 = arith.constant 128 : i32
    %189 = vector.broadcast %c128_i32 : i32 to vector<8x128xi32>
    %190 = arith.cmpi slt, %0, %189 : vector<8x128xi32>
    %191 = arith.andi %188, %190 : vector<8x128xi1>
    %cst_67 = arith.constant 0.000000e+00 : f32
    %192 = vector.broadcast %cst_67 : f32 to vector<8x128xf32>
    %193 = arith.select %191, %161, %192 : vector<8x128xi1>, vector<8x128xf32>
    %cst_68 = arith.constant dense<0.000000e+00> : vector<8xf32>
    %194 = vector.multi_reduction <add>, %193, %cst_68 [1] : vector<8x128xf32> to vector<8xf32>
    %195 = vector.shape_cast %194 : vector<8xf32> to vector<8x1xf32>
    %cst_69 = arith.constant 1.562500e-02 : f32
    %196 = vector.broadcast %cst_69 : f32 to vector<8x1xf32>
    %197 = arith.mulf %195, %196 : vector<8x1xf32>
    %198 = arith.mulf %193, %193 : vector<8x128xf32>
    %cst_70 = arith.constant dense<0.000000e+00> : vector<8xf32>
    %199 = vector.multi_reduction <add>, %198, %cst_70 [1] : vector<8x128xf32> to vector<8xf32>
    %200 = vector.shape_cast %199 : vector<8xf32> to vector<8x1xf32>
    %cst_71 = arith.constant 1.562500e-02 : f32
    %201 = vector.broadcast %cst_71 : f32 to vector<8x1xf32>
    %202 = arith.mulf %200, %201 : vector<8x1xf32>
    %203 = arith.mulf %197, %197 : vector<8x1xf32>
    %204 = arith.subf %202, %203 : vector<8x1xf32>
    %205 = vector.broadcast %197 : vector<8x1xf32> to vector<8x128xf32>
    %206 = arith.subf %193, %205 : vector<8x128xf32>
    %cst_72 = arith.constant 9.99999974E-6 : f32
    %207 = vector.broadcast %cst_72 : f32 to vector<8x1xf32>
    %208 = arith.addf %204, %207 : vector<8x1xf32>
    %209 = math.rsqrt %208 : vector<8x1xf32>
    %210 = vector.broadcast %209 : vector<8x1xf32> to vector<8x128xf32>
    %211 = arith.mulf %206, %210 : vector<8x128xf32>
    %c15 = arith.constant 15 : index
    %c0_73 = arith.constant 0 : index
    %212 = vector.load %arg3[%c15, %c0_73] : memref<40x128xf32, #tpu.memory_space<vmem>>, vector<1x128xf32>
    %213 = vector.broadcast %212 : vector<1x128xf32> to vector<8x128xf32>
    %214 = arith.mulf %211, %213 : vector<8x128xf32>
    %c896 = arith.constant 896 : index
    %c0_74 = arith.constant 0 : index
    %215 = vector.load %arg2[%c896, %c0_74] : memref<1920x128xf32, #tpu.memory_space<vmem>>, vector<128x128xf32>
    %cst_75 = arith.constant dense<0.000000e+00> : vector<8x128xf32>
    %216 = tpu.matmul %186, %215, %cst_75 {dimension_numbers = #tpu.dot_dimension_numbers<[1], [0], [0], [1], [0, 0, 1, 1], [], []>} : vector<8x128xf32>, vector<128x128xf32>, vector<8x128xf32> -> vector<8x128xf32>
    %c16 = arith.constant 16 : index
    %c0_76 = arith.constant 0 : index
    %217 = vector.load %arg3[%c16, %c0_76] : memref<40x128xf32, #tpu.memory_space<vmem>>, vector<1x128xf32>
    %218 = vector.broadcast %217 : vector<1x128xf32> to vector<8x128xf32>
    %219 = arith.addf %216, %218 : vector<8x128xf32>
    %cst_77 = arith.constant 0.000000e+00 : f32
    %220 = vector.broadcast %cst_77 : f32 to vector<8x128xf32>
    %221 = arith.maximumf %219, %220 : vector<8x128xf32>
    %222 = arith.mulf %221, %221 : vector<8x128xf32>
    %cst_78 = arith.constant dense<0.000000e+00> : vector<8xf32>
    %223 = vector.multi_reduction <add>, %222, %cst_78 [1] : vector<8x128xf32> to vector<8xf32>
    %224 = vector.shape_cast %223 : vector<8xf32> to vector<8x1xf32>
    %cst_79 = arith.constant 7.812500e-03 : f32
    %225 = vector.broadcast %cst_79 : f32 to vector<8x1xf32>
    %226 = arith.mulf %224, %225 : vector<8x1xf32>
    %227 = arith.mulf %222, %222 : vector<8x128xf32>
    %cst_80 = arith.constant dense<0.000000e+00> : vector<8xf32>
    %228 = vector.multi_reduction <add>, %227, %cst_80 [1] : vector<8x128xf32> to vector<8xf32>
    %229 = vector.shape_cast %228 : vector<8xf32> to vector<8x1xf32>
    %cst_81 = arith.constant 7.812500e-03 : f32
    %230 = vector.broadcast %cst_81 : f32 to vector<8x1xf32>
    %231 = arith.mulf %229, %230 : vector<8x1xf32>
    %232 = arith.mulf %226, %226 : vector<8x1xf32>
    %233 = arith.subf %231, %232 : vector<8x1xf32>
    %234 = vector.broadcast %226 : vector<8x1xf32> to vector<8x128xf32>
    %235 = arith.subf %222, %234 : vector<8x128xf32>
    %cst_82 = arith.constant 9.99999974E-6 : f32
    %236 = vector.broadcast %cst_82 : f32 to vector<8x1xf32>
    %237 = arith.addf %233, %236 : vector<8x1xf32>
    %238 = math.rsqrt %237 : vector<8x1xf32>
    %239 = vector.broadcast %238 : vector<8x1xf32> to vector<8x128xf32>
    %240 = arith.mulf %235, %239 : vector<8x128xf32>
    %c17 = arith.constant 17 : index
    %c0_83 = arith.constant 0 : index
    %241 = vector.load %arg3[%c17, %c0_83] : memref<40x128xf32, #tpu.memory_space<vmem>>, vector<1x128xf32>
    %242 = vector.broadcast %241 : vector<1x128xf32> to vector<8x128xf32>
    %243 = arith.mulf %240, %242 : vector<8x128xf32>
    %c1024 = arith.constant 1024 : index
    %c0_84 = arith.constant 0 : index
    %244 = vector.load %arg2[%c1024, %c0_84] : memref<1920x128xf32, #tpu.memory_space<vmem>>, vector<128x128xf32>
    %cst_85 = arith.constant dense<0.000000e+00> : vector<8x128xf32>
    %245 = tpu.matmul %243, %244, %cst_85 {dimension_numbers = #tpu.dot_dimension_numbers<[1], [0], [0], [1], [0, 0, 1, 1], [], []>} : vector<8x128xf32>, vector<128x128xf32>, vector<8x128xf32> -> vector<8x128xf32>
    %c18 = arith.constant 18 : index
    %c0_86 = arith.constant 0 : index
    %246 = vector.load %arg3[%c18, %c0_86] : memref<40x128xf32, #tpu.memory_space<vmem>>, vector<1x128xf32>
    %247 = vector.broadcast %246 : vector<1x128xf32> to vector<8x128xf32>
    %248 = arith.addf %245, %247 : vector<8x128xf32>
    %cst_87 = arith.constant dense<0.000000e+00> : vector<8xf32>
    %249 = vector.multi_reduction <add>, %248, %cst_87 [1] : vector<8x128xf32> to vector<8xf32>
    %250 = vector.shape_cast %249 : vector<8xf32> to vector<8x1xf32>
    %cst_88 = arith.constant 1.562500e-02 : f32
    %251 = vector.broadcast %cst_88 : f32 to vector<8x1xf32>
    %252 = arith.mulf %250, %251 : vector<8x1xf32>
    %253 = arith.mulf %248, %248 : vector<8x128xf32>
    %cst_89 = arith.constant dense<0.000000e+00> : vector<8xf32>
    %254 = vector.multi_reduction <add>, %253, %cst_89 [1] : vector<8x128xf32> to vector<8xf32>
    %255 = vector.shape_cast %254 : vector<8xf32> to vector<8x1xf32>
    %cst_90 = arith.constant 1.562500e-02 : f32
    %256 = vector.broadcast %cst_90 : f32 to vector<8x1xf32>
    %257 = arith.mulf %255, %256 : vector<8x1xf32>
    %258 = arith.mulf %252, %252 : vector<8x1xf32>
    %259 = arith.subf %257, %258 : vector<8x1xf32>
    %260 = vector.broadcast %252 : vector<8x1xf32> to vector<8x128xf32>
    %261 = arith.subf %248, %260 : vector<8x128xf32>
    %cst_91 = arith.constant 9.99999974E-6 : f32
    %262 = vector.broadcast %cst_91 : f32 to vector<8x1xf32>
    %263 = arith.addf %259, %262 : vector<8x1xf32>
    %264 = math.rsqrt %263 : vector<8x1xf32>
    %265 = vector.broadcast %264 : vector<8x1xf32> to vector<8x128xf32>
    %266 = arith.mulf %261, %265 : vector<8x128xf32>
    %c19 = arith.constant 19 : index
    %c0_92 = arith.constant 0 : index
    %267 = vector.load %arg3[%c19, %c0_92] : memref<40x128xf32, #tpu.memory_space<vmem>>, vector<1x128xf32>
    %268 = vector.broadcast %267 : vector<1x128xf32> to vector<8x128xf32>
    %269 = arith.mulf %266, %268 : vector<8x128xf32>
    %c20 = arith.constant 20 : index
    %c0_93 = arith.constant 0 : index
    %270 = vector.load %arg3[%c20, %c0_93] : memref<40x128xf32, #tpu.memory_space<vmem>>, vector<1x128xf32>
    %271 = vector.broadcast %270 : vector<1x128xf32> to vector<8x128xf32>
    %272 = arith.mulf %186, %271 : vector<8x128xf32>
    %273 = arith.addf %272, %269 : vector<8x128xf32>
    %c1152 = arith.constant 1152 : index
    %c0_94 = arith.constant 0 : index
    %274 = vector.load %arg2[%c1152, %c0_94] : memref<1920x128xf32, #tpu.memory_space<vmem>>, vector<128x128xf32>
    %cst_95 = arith.constant dense<0.000000e+00> : vector<8x128xf32>
    %275 = tpu.matmul %273, %274, %cst_95 {dimension_numbers = #tpu.dot_dimension_numbers<[1], [0], [0], [1], [0, 0, 1, 1], [], []>} : vector<8x128xf32>, vector<128x128xf32>, vector<8x128xf32> -> vector<8x128xf32>
    %c21 = arith.constant 21 : index
    %c0_96 = arith.constant 0 : index
    %276 = vector.load %arg3[%c21, %c0_96] : memref<40x128xf32, #tpu.memory_space<vmem>>, vector<1x128xf32>
    %277 = vector.broadcast %276 : vector<1x128xf32> to vector<8x128xf32>
    %278 = arith.addf %275, %277 : vector<8x128xf32>
    %c1280 = arith.constant 1280 : index
    %c0_97 = arith.constant 0 : index
    %279 = vector.load %arg2[%c1280, %c0_97] : memref<1920x128xf32, #tpu.memory_space<vmem>>, vector<128x128xf32>
    %cst_98 = arith.constant dense<0.000000e+00> : vector<8x128xf32>
    %280 = tpu.matmul %214, %279, %cst_98 {dimension_numbers = #tpu.dot_dimension_numbers<[1], [0], [0], [1], [0, 0, 1, 1], [], []>} : vector<8x128xf32>, vector<128x128xf32>, vector<8x128xf32> -> vector<8x128xf32>
    %c22 = arith.constant 22 : index
    %c0_99 = arith.constant 0 : index
    %281 = vector.load %arg3[%c22, %c0_99] : memref<40x128xf32, #tpu.memory_space<vmem>>, vector<1x128xf32>
    %282 = vector.broadcast %281 : vector<1x128xf32> to vector<8x128xf32>
    %283 = arith.addf %280, %282 : vector<8x128xf32>
    %cst_100 = arith.constant 0.000000e+00 : f32
    %284 = vector.broadcast %cst_100 : f32 to vector<8x128xf32>
    %285 = arith.maximumf %283, %284 : vector<8x128xf32>
    %286 = arith.mulf %285, %285 : vector<8x128xf32>
    %cst_101 = arith.constant dense<0.000000e+00> : vector<8xf32>
    %287 = vector.multi_reduction <add>, %286, %cst_101 [1] : vector<8x128xf32> to vector<8xf32>
    %288 = vector.shape_cast %287 : vector<8xf32> to vector<8x1xf32>
    %cst_102 = arith.constant 7.812500e-03 : f32
    %289 = vector.broadcast %cst_102 : f32 to vector<8x1xf32>
    %290 = arith.mulf %288, %289 : vector<8x1xf32>
    %291 = arith.mulf %286, %286 : vector<8x128xf32>
    %cst_103 = arith.constant dense<0.000000e+00> : vector<8xf32>
    %292 = vector.multi_reduction <add>, %291, %cst_103 [1] : vector<8x128xf32> to vector<8xf32>
    %293 = vector.shape_cast %292 : vector<8xf32> to vector<8x1xf32>
    %cst_104 = arith.constant 7.812500e-03 : f32
    %294 = vector.broadcast %cst_104 : f32 to vector<8x1xf32>
    %295 = arith.mulf %293, %294 : vector<8x1xf32>
    %296 = arith.mulf %290, %290 : vector<8x1xf32>
    %297 = arith.subf %295, %296 : vector<8x1xf32>
    %298 = vector.broadcast %290 : vector<8x1xf32> to vector<8x128xf32>
    %299 = arith.subf %286, %298 : vector<8x128xf32>
    %cst_105 = arith.constant 9.99999974E-6 : f32
    %300 = vector.broadcast %cst_105 : f32 to vector<8x1xf32>
    %301 = arith.addf %297, %300 : vector<8x1xf32>
    %302 = math.rsqrt %301 : vector<8x1xf32>
    %303 = vector.broadcast %302 : vector<8x1xf32> to vector<8x128xf32>
    %304 = arith.mulf %299, %303 : vector<8x128xf32>
    %c23 = arith.constant 23 : index
    %c0_106 = arith.constant 0 : index
    %305 = vector.load %arg3[%c23, %c0_106] : memref<40x128xf32, #tpu.memory_space<vmem>>, vector<1x128xf32>
    %306 = vector.broadcast %305 : vector<1x128xf32> to vector<8x128xf32>
    %307 = arith.mulf %304, %306 : vector<8x128xf32>
    %c1408 = arith.constant 1408 : index
    %c0_107 = arith.constant 0 : index
    %308 = vector.load %arg2[%c1408, %c0_107] : memref<1920x128xf32, #tpu.memory_space<vmem>>, vector<128x128xf32>
    %cst_108 = arith.constant dense<0.000000e+00> : vector<8x128xf32>
    %309 = tpu.matmul %307, %308, %cst_108 {dimension_numbers = #tpu.dot_dimension_numbers<[1], [0], [0], [1], [0, 0, 1, 1], [], []>} : vector<8x128xf32>, vector<128x128xf32>, vector<8x128xf32> -> vector<8x128xf32>
    %c24 = arith.constant 24 : index
    %c0_109 = arith.constant 0 : index
    %310 = vector.load %arg3[%c24, %c0_109] : memref<40x128xf32, #tpu.memory_space<vmem>>, vector<1x128xf32>
    %311 = vector.broadcast %310 : vector<1x128xf32> to vector<8x128xf32>
    %312 = arith.addf %309, %311 : vector<8x128xf32>
    %cst_110 = arith.constant dense<0.000000e+00> : vector<8xf32>
    %313 = vector.multi_reduction <add>, %312, %cst_110 [1] : vector<8x128xf32> to vector<8xf32>
    %314 = vector.shape_cast %313 : vector<8xf32> to vector<8x1xf32>
    %cst_111 = arith.constant 1.562500e-02 : f32
    %315 = vector.broadcast %cst_111 : f32 to vector<8x1xf32>
    %316 = arith.mulf %314, %315 : vector<8x1xf32>
    %317 = arith.mulf %312, %312 : vector<8x128xf32>
    %cst_112 = arith.constant dense<0.000000e+00> : vector<8xf32>
    %318 = vector.multi_reduction <add>, %317, %cst_112 [1] : vector<8x128xf32> to vector<8xf32>
    %319 = vector.shape_cast %318 : vector<8xf32> to vector<8x1xf32>
    %cst_113 = arith.constant 1.562500e-02 : f32
    %320 = vector.broadcast %cst_113 : f32 to vector<8x1xf32>
    %321 = arith.mulf %319, %320 : vector<8x1xf32>
    %322 = arith.mulf %316, %316 : vector<8x1xf32>
    %323 = arith.subf %321, %322 : vector<8x1xf32>
    %324 = vector.broadcast %316 : vector<8x1xf32> to vector<8x128xf32>
    %325 = arith.subf %312, %324 : vector<8x128xf32>
    %cst_114 = arith.constant 9.99999974E-6 : f32
    %326 = vector.broadcast %cst_114 : f32 to vector<8x1xf32>
    %327 = arith.addf %323, %326 : vector<8x1xf32>
    %328 = math.rsqrt %327 : vector<8x1xf32>
    %329 = vector.broadcast %328 : vector<8x1xf32> to vector<8x128xf32>
    %330 = arith.mulf %325, %329 : vector<8x128xf32>
    %c25 = arith.constant 25 : index
    %c0_115 = arith.constant 0 : index
    %331 = vector.load %arg3[%c25, %c0_115] : memref<40x128xf32, #tpu.memory_space<vmem>>, vector<1x128xf32>
    %332 = vector.broadcast %331 : vector<1x128xf32> to vector<8x128xf32>
    %333 = arith.mulf %330, %332 : vector<8x128xf32>
    %c26 = arith.constant 26 : index
    %c0_116 = arith.constant 0 : index
    %334 = vector.load %arg3[%c26, %c0_116] : memref<40x128xf32, #tpu.memory_space<vmem>>, vector<1x128xf32>
    %335 = vector.broadcast %334 : vector<1x128xf32> to vector<8x128xf32>
    %336 = arith.mulf %214, %335 : vector<8x128xf32>
    %337 = arith.addf %336, %333 : vector<8x128xf32>
    %c1536 = arith.constant 1536 : index
    %c0_117 = arith.constant 0 : index
    %338 = vector.load %arg2[%c1536, %c0_117] : memref<1920x128xf32, #tpu.memory_space<vmem>>, vector<128x128xf32>
    %cst_118 = arith.constant dense<0.000000e+00> : vector<8x128xf32>
    %339 = tpu.matmul %337, %338, %cst_118 {dimension_numbers = #tpu.dot_dimension_numbers<[1], [0], [0], [1], [0, 0, 1, 1], [], []>} : vector<8x128xf32>, vector<128x128xf32>, vector<8x128xf32> -> vector<8x128xf32>
    %c27 = arith.constant 27 : index
    %c0_119 = arith.constant 0 : index
    %340 = vector.load %arg3[%c27, %c0_119] : memref<40x128xf32, #tpu.memory_space<vmem>>, vector<1x128xf32>
    %341 = vector.broadcast %340 : vector<1x128xf32> to vector<8x128xf32>
    %342 = arith.addf %339, %341 : vector<8x128xf32>
    %cst_120 = arith.constant 0.000000e+00 : f32
    %343 = vector.broadcast %cst_120 : f32 to vector<8x128xf32>
    %344 = arith.maximumf %342, %343 : vector<8x128xf32>
    %345 = arith.mulf %344, %344 : vector<8x128xf32>
    %cst_121 = arith.constant dense<0.000000e+00> : vector<8xf32>
    %346 = vector.multi_reduction <add>, %345, %cst_121 [1] : vector<8x128xf32> to vector<8xf32>
    %347 = vector.shape_cast %346 : vector<8xf32> to vector<8x1xf32>
    %cst_122 = arith.constant 7.812500e-03 : f32
    %348 = vector.broadcast %cst_122 : f32 to vector<8x1xf32>
    %349 = arith.mulf %347, %348 : vector<8x1xf32>
    %350 = arith.mulf %345, %345 : vector<8x128xf32>
    %cst_123 = arith.constant dense<0.000000e+00> : vector<8xf32>
    %351 = vector.multi_reduction <add>, %350, %cst_123 [1] : vector<8x128xf32> to vector<8xf32>
    %352 = vector.shape_cast %351 : vector<8xf32> to vector<8x1xf32>
    %cst_124 = arith.constant 7.812500e-03 : f32
    %353 = vector.broadcast %cst_124 : f32 to vector<8x1xf32>
    %354 = arith.mulf %352, %353 : vector<8x1xf32>
    %355 = arith.mulf %349, %349 : vector<8x1xf32>
    %356 = arith.subf %354, %355 : vector<8x1xf32>
    %357 = vector.broadcast %349 : vector<8x1xf32> to vector<8x128xf32>
    %358 = arith.subf %345, %357 : vector<8x128xf32>
    %cst_125 = arith.constant 9.99999974E-6 : f32
    %359 = vector.broadcast %cst_125 : f32 to vector<8x1xf32>
    %360 = arith.addf %356, %359 : vector<8x1xf32>
    %361 = math.rsqrt %360 : vector<8x1xf32>
    %362 = vector.broadcast %361 : vector<8x1xf32> to vector<8x128xf32>
    %363 = arith.mulf %358, %362 : vector<8x128xf32>
    %c28 = arith.constant 28 : index
    %c0_126 = arith.constant 0 : index
    %364 = vector.load %arg3[%c28, %c0_126] : memref<40x128xf32, #tpu.memory_space<vmem>>, vector<1x128xf32>
    %365 = vector.broadcast %364 : vector<1x128xf32> to vector<8x128xf32>
    %366 = arith.mulf %363, %365 : vector<8x128xf32>
    %c1664 = arith.constant 1664 : index
    %c0_127 = arith.constant 0 : index
    %367 = vector.load %arg2[%c1664, %c0_127] : memref<1920x128xf32, #tpu.memory_space<vmem>>, vector<128x128xf32>
    %cst_128 = arith.constant dense<0.000000e+00> : vector<8x128xf32>
    %368 = tpu.matmul %366, %367, %cst_128 {dimension_numbers = #tpu.dot_dimension_numbers<[1], [0], [0], [1], [0, 0, 1, 1], [], []>} : vector<8x128xf32>, vector<128x128xf32>, vector<8x128xf32> -> vector<8x128xf32>
    %c29 = arith.constant 29 : index
    %c0_129 = arith.constant 0 : index
    %369 = vector.load %arg3[%c29, %c0_129] : memref<40x128xf32, #tpu.memory_space<vmem>>, vector<1x128xf32>
    %370 = vector.broadcast %369 : vector<1x128xf32> to vector<8x128xf32>
    %371 = arith.addf %368, %370 : vector<8x128xf32>
    %cst_130 = arith.constant dense<0.000000e+00> : vector<8xf32>
    %372 = vector.multi_reduction <add>, %371, %cst_130 [1] : vector<8x128xf32> to vector<8xf32>
    %373 = vector.shape_cast %372 : vector<8xf32> to vector<8x1xf32>
    %cst_131 = arith.constant 1.562500e-02 : f32
    %374 = vector.broadcast %cst_131 : f32 to vector<8x1xf32>
    %375 = arith.mulf %373, %374 : vector<8x1xf32>
    %376 = arith.mulf %371, %371 : vector<8x128xf32>
    %cst_132 = arith.constant dense<0.000000e+00> : vector<8xf32>
    %377 = vector.multi_reduction <add>, %376, %cst_132 [1] : vector<8x128xf32> to vector<8xf32>
    %378 = vector.shape_cast %377 : vector<8xf32> to vector<8x1xf32>
    %cst_133 = arith.constant 1.562500e-02 : f32
    %379 = vector.broadcast %cst_133 : f32 to vector<8x1xf32>
    %380 = arith.mulf %378, %379 : vector<8x1xf32>
    %381 = arith.mulf %375, %375 : vector<8x1xf32>
    %382 = arith.subf %380, %381 : vector<8x1xf32>
    %383 = vector.broadcast %375 : vector<8x1xf32> to vector<8x128xf32>
    %384 = arith.subf %371, %383 : vector<8x128xf32>
    %cst_134 = arith.constant 9.99999974E-6 : f32
    %385 = vector.broadcast %cst_134 : f32 to vector<8x1xf32>
    %386 = arith.addf %382, %385 : vector<8x1xf32>
    %387 = math.rsqrt %386 : vector<8x1xf32>
    %388 = vector.broadcast %387 : vector<8x1xf32> to vector<8x128xf32>
    %389 = arith.mulf %384, %388 : vector<8x128xf32>
    %c30 = arith.constant 30 : index
    %c0_135 = arith.constant 0 : index
    %390 = vector.load %arg3[%c30, %c0_135] : memref<40x128xf32, #tpu.memory_space<vmem>>, vector<1x128xf32>
    %391 = vector.broadcast %390 : vector<1x128xf32> to vector<8x128xf32>
    %392 = arith.mulf %389, %391 : vector<8x128xf32>
    %c31 = arith.constant 31 : index
    %c0_136 = arith.constant 0 : index
    %393 = vector.load %arg3[%c31, %c0_136] : memref<40x128xf32, #tpu.memory_space<vmem>>, vector<1x128xf32>
    %394 = vector.broadcast %393 : vector<1x128xf32> to vector<8x128xf32>
    %395 = arith.mulf %337, %394 : vector<8x128xf32>
    %396 = arith.addf %395, %392 : vector<8x128xf32>
    %c1792 = arith.constant 1792 : index
    %c0_137 = arith.constant 0 : index
    %397 = vector.load %arg2[%c1792, %c0_137] : memref<1920x128xf32, #tpu.memory_space<vmem>>, vector<128x128xf32>
    %cst_138 = arith.constant dense<0.000000e+00> : vector<8x128xf32>
    %398 = tpu.matmul %396, %397, %cst_138 {dimension_numbers = #tpu.dot_dimension_numbers<[1], [0], [0], [1], [0, 0, 1, 1], [], []>} : vector<8x128xf32>, vector<128x128xf32>, vector<8x128xf32> -> vector<8x128xf32>
    %c32 = arith.constant 32 : index
    %c0_139 = arith.constant 0 : index
    %399 = vector.load %arg3[%c32, %c0_139] : memref<40x128xf32, #tpu.memory_space<vmem>>, vector<1x128xf32>
    %400 = vector.broadcast %399 : vector<1x128xf32> to vector<8x128xf32>
    %401 = arith.addf %398, %400 : vector<8x128xf32>
    %c6_i32 = arith.constant 6 : i32
    %402 = vector.broadcast %c6_i32 : i32 to vector<8x128xi32>
    %403 = arith.cmpi slt, %0, %402 : vector<8x128xi32>
    %cst_140 = arith.constant -1.000000e+30 : f32
    %404 = vector.broadcast %cst_140 : f32 to vector<8x128xf32>
    %405 = arith.select %403, %278, %404 : vector<8x128xi1>, vector<8x128xf32>
    %cst_141 = arith.constant dense<0xFF800000> : vector<8xf32>
    %406 = vector.multi_reduction <maximumf>, %405, %cst_141 [1] : vector<8x128xf32> to vector<8xf32>
    %407 = vector.shape_cast %406 : vector<8xf32> to vector<8x1xf32>
    %408 = vector.broadcast %407 : vector<8x1xf32> to vector<8x128xf32>
    %409 = arith.subf %405, %408 : vector<8x128xf32>
    %410 = math.exp %409 : vector<8x128xf32>
    %cst_142 = arith.constant dense<0.000000e+00> : vector<8xf32>
    %411 = vector.multi_reduction <add>, %410, %cst_142 [1] : vector<8x128xf32> to vector<8xf32>
    %412 = vector.shape_cast %411 : vector<8xf32> to vector<8x1xf32>
    %413 = vector.broadcast %412 : vector<8x1xf32> to vector<8x128xf32>
    %414 = arith.divf %410, %413 : vector<8x128xf32>
    %415 = arith.addf %414, %401 : vector<8x128xf32>
    %c0_143 = arith.constant 0 : index
    %c0_144 = arith.constant 0 : index
    %416 = vector.load %arg4[%c0_143, %c0_144] : memref<8x128xf32, #tpu.memory_space<vmem>>, vector<8x128xf32>
    tpu.vector_store %arg4[%c0_143, %c0_144], %415 {strides = array<i32>} : memref<8x128xf32, #tpu.memory_space<vmem>>, vector<8x128xf32>,
    return
  }
  func.func @transform_0(%arg0: i32) -> (i32, i32) {
    %c0_i32 = arith.constant 0 : i32
    %c0_i32_0 = arith.constant 0 : i32
    return %arg0, %c0_i32 : i32, i32
  }
  func.func @transform_1(%arg0: i32) -> (i32, i32) {
    %c0_i32 = arith.constant 0 : i32
    %c0_i32_0 = arith.constant 0 : i32
    %c0_i32_1 = arith.constant 0 : i32
    return %c0_i32, %c0_i32_0 : i32, i32
  }
  func.func @transform_2(%arg0: i32) -> (i32, i32) {
    %c0_i32 = arith.constant 0 : i32
    %c0_i32_0 = arith.constant 0 : i32
    %c0_i32_1 = arith.constant 0 : i32
    return %c0_i32, %c0_i32_0 : i32, i32
  }
  func.func @transform_3(%arg0: i32) -> (i32, i32) {
    %c0_i32 = arith.constant 0 : i32
    %c0_i32_0 = arith.constant 0 : i32
    return %arg0, %c0_i32 : i32, i32
  }
}

</mosaic_0001>

<llo_original>
// kernel: tpu_custom_call.1
$region0: #{tpu_custom_call.1}
  #allocation0 [shape = 'u32[]', space=smem, size = 0x4, offset = 0x4, fixed_abs, tag = 'smem constant byte address 0x4 - core index']
  #allocation1 [shape = 'u32[144,128]{1,0:T(1,128)}', space=vmem, size = 0x12000, scoped, tag = 'internal scratch']
  %s0 = inlined_call_operand.hbm [shape: f32[16,128], index: 0, kind: input, shape index: {}]
  %s1 = inlined_call_operand.hbm [shape: f32[8,128], index: 1, kind: output, shape index: {}]
  %s2 = sld [smem:[#allocation0]]
  $region18: #{tpu_custom_call.1} parent=0
    _
  %s4 = ssub.s32 1, %s2
  %s5 = scalar_select 0, %s4, %s2
  $region1: #{tpu_custom_call.1} parent=0
    #allocation2 [shape = 'u8[8192]{0}', space=vmem, size = 0x2000, scoped, tag = 'input window, operand 0, single buffered']
    #allocation3 [shape = 's32[1]{0}', space=sflag, size = 0x4, scoped, tag = 'scoped memory for tpu_custom_call.1']
    #allocation4 [shape = 's32[1]{0}', space=sflag, size = 0x4, scoped, tag = 'scoped memory for tpu_custom_call.1']
    #allocation5 [shape = 'u8[4096]{0}', space=vmem, size = 0x1000, scoped, tag = 'output window, operand 0, single buffered']
    %6 = vsyncpa [#allocation3], 0
    %7 = vsyncpa [#allocation4], 0
    // Predicated region
    $region2: #{tpu_custom_call.1} parent=1 // pred_check
      _
    $region3: #{tpu_custom_call.1} parent=1 // pred_check_branch
      %9 = sbr.rel (0) target = $region5
    $region4: #{tpu_custom_call.1} parent=1 // pred_region
      %s11 = ssub.s32 256, 256
      %12 = vsyncadd [#allocation3], %s11
      %s13 = sshll.u32 [#allocation2], 4
      %s14 = int_to_ptr.vmem [resolvable:$true] %s13
      %19 = dma.hbm_to_vmem [thread:$0]  %s0, 256, %s14, [#allocation3], 128, 128, 8
    $region5: #{tpu_custom_call.1} parent=1 // pred_fallthru
      _
    // Predicated region
    $region6: #{tpu_custom_call.1} parent=1 // pred_check
      _
    $region7: #{tpu_custom_call.1} parent=1 // pred_check_branch
      %21 = sbr.rel (0) target = $region9
    $region8: #{tpu_custom_call.1} parent=1 // pred_region
      %22 = dma.done [#allocation3], 256
    $region9: #{tpu_custom_call.1} parent=1 // pred_fallthru
      _
    %v23 = vld [vmem:[#allocation2 + $0x2] ss:$0 sm:$0xff]
    %24 = vst [vmem:[#allocation5] sm:$0xff] %v23
    // Predicated region
    $region10: #{tpu_custom_call.1} parent=1 // pred_check
      _
    $region11: #{tpu_custom_call.1} parent=1 // pred_check_branch
      %26 = sbr.rel (0) target = $region13
    $region12: #{tpu_custom_call.1} parent=1 // pred_region
      %s28 = ssub.s32 128, 128
      %29 = vsyncadd [#allocation4], %s28
      %s31 = sshll.u32 [#allocation5], 4
      %s32 = int_to_ptr.vmem [resolvable:$true] %s31
      %34 = dma.vmem_to_hbm [thread:$0]  %s32, 128, %s1, [#allocation4]
    $region13: #{tpu_custom_call.1} parent=1 // pred_fallthru
      _
    // Predicated region
    $region14: #{tpu_custom_call.1} parent=1 // pred_check
      _
    $region15: #{tpu_custom_call.1} parent=1 // pred_check_branch
      %36 = sbr.rel (0) target = $region17
    $region16: #{tpu_custom_call.1} parent=1 // pred_region
      %37 = dma.done [#allocation4], 128
    $region17: #{tpu_custom_call.1} parent=1 // pred_fallthru
      _
    %38 = vsyncpa [#allocation3], 1
    %39 = vsyncpa [#allocation4], 1

// kernel: _actor_forward.1
$region0: #{_actor_forward.1}
  #allocation0 [shape = 'u32[]', space=smem, size = 0x4, offset = 0x4, fixed_abs, tag = 'smem constant byte address 0x4 - core index']
  #allocation1 [shape = 'u32[144,128]{1,0:T(1,128)}', space=vmem, size = 0x12000, scoped, tag = 'internal scratch']
  %s0 = inlined_call_operand.vmem [shape: f32[8,128], index: 0, kind: input, shape index: {}]
  %s1 = inlined_call_operand.hbm [shape: f32[1920,128], index: 1, kind: input, shape index: {}]
  %s2 = inlined_call_operand.hbm [shape: f32[40,128], index: 2, kind: input, shape index: {}]
  %s3 = inlined_call_operand.vmem [shape: f32[8,128], index: 3, kind: output, shape index: {}]
  %s4 = sld [smem:[#allocation0]]
  $region30: #{_actor_forward.1} parent=0
    _
  %s6 = ssub.s32 1, %s4
  %s7 = scalar_select 0, %s6, %s4
  $region1: #{_actor_forward.1} parent=0
    #allocation2 [shape = 'u8[983040]{0}', space=vmem, size = 0xf0000, scoped, tag = 'input window, operand 1, single buffered']
    #allocation3 [shape = 's32[1]{0}', space=sflag, size = 0x4, scoped, tag = 'scoped memory for _actor_forward.1']
    #allocation4 [shape = 'u8[20480]{0}', space=vmem, size = 0x5000, scoped, tag = 'input window, operand 2, single buffered']
    #allocation5 [shape = 's32[1]{0}', space=sflag, size = 0x4, scoped, tag = 'scoped memory for _actor_forward.1']
    %8 = vsyncpa [#allocation3], 0
    %9 = vsyncpa [#allocation5], 0
    // Predicated region
    $region2: #{_actor_forward.1} parent=1 // pred_check
      _
    $region3: #{_actor_forward.1} parent=1 // pred_check_branch
      %11 = sbr.rel (0) target = $region5
    $region4: #{_actor_forward.1} parent=1 // pred_region
      _
    $region5: #{_actor_forward.1} parent=1 // pred_fallthru
      _
    // Predicated region
    $region6: #{_actor_forward.1} parent=1 // pred_check
      _
    $region7: #{_actor_forward.1} parent=1 // pred_check_branch
      %13 = sbr.rel (0) target = $region9
    $region8: #{_actor_forward.1} parent=1 // pred_region
      %s15 = ssub.s32 30720, 30720
      %16 = vsyncadd [#allocation3], %s15
      %s17 = sshll.u32 [#allocation2], 4
      %s18 = int_to_ptr.vmem [resolvable:$true] %s17
      %23 = dma.hbm_to_vmem [thread:$0]  %s1, 30720, %s18, [#allocation3], 128, 128, 8
    $region9: #{_actor_forward.1} parent=1 // pred_fallthru
      _
    // Predicated region
    $region10: #{_actor_forward.1} parent=1 // pred_check
      _
    $region11: #{_actor_forward.1} parent=1 // pred_check_branch
      %25 = sbr.rel (0) target = $region13
    $region12: #{_actor_forward.1} parent=1 // pred_region
      %s27 = ssub.s32 640, 640
      %28 = vsyncadd [#allocation5], %s27
      %s29 = sshll.u32 [#allocation4], 4
      %s30 = int_to_ptr.vmem [resolvable:$true] %s29
      %35 = dma.hbm_to_vmem [thread:$0]  %s2, 640, %s30, [#allocation5], 128, 128, 8
    $region13: #{_actor_forward.1} parent=1 // pred_fallthru
      _
    // Predicated region
    $region14: #{_actor_forward.1} parent=1 // pred_check
      _
    $region15: #{_actor_forward.1} parent=1 // pred_check_branch
      %37 = sbr.rel (0) target = $region17
    $region16: #{_actor_forward.1} parent=1 // pred_region
      %38 = dma.done [#allocation3], 30720
    $region17: #{_actor_forward.1} parent=1 // pred_fallthru
      _
    // Predicated region
    $region18: #{_actor_forward.1} parent=1 // pred_check
      _
    $region19: #{_actor_forward.1} parent=1 // pred_check_branch
      %40 = sbr.rel (0) target = $region21
    $region20: #{_actor_forward.1} parent=1 // pred_region
      %41 = dma.done [#allocation5], 640
    $region21: #{_actor_forward.1} parent=1 // pred_fallthru
      _
    %v42 = vlaneseq
    %v43 = vand.u32 %v42, 127
    %v44 = vld [vmem:[%s0] sm:$0xff]
    %v45 = vld [vmem:[#allocation2] sm:$0xff]
    %v46 = vld [vmem:[#allocation2 + $0x8] sm:$0xff]
    %v47 = vld [vmem:[#allocation2 + $0x10] sm:$0xff]
    %v48 = vld [vmem:[#allocation2 + $0x18] sm:$0xff]
    %v49 = vld [vmem:[#allocation2 + $0x20] sm:$0xff]
    %v50 = vld [vmem:[#allocation2 + $0x28] sm:$0xff]
    %v51 = vld [vmem:[#allocation2 + $0x30] sm:$0xff]
    %v52 = vld [vmem:[#allocation2 + $0x38] sm:$0xff]
    %v53 = vld [vmem:[#allocation2 + $0x40] sm:$0xff]
    %v54 = vld [vmem:[#allocation2 + $0x48] sm:$0xff]
    %v55 = vld [vmem:[#allocation2 + $0x50] sm:$0xff]
    %v56 = vld [vmem:[#allocation2 + $0x58] sm:$0xff]
    %v57 = vld [vmem:[#allocation2 + $0x60] sm:$0xff]
    %v58 = vld [vmem:[#allocation2 + $0x68] sm:$0xff]
    %v59 = vld [vmem:[#allocation2 + $0x70] sm:$0xff]
    %v60 = vld [vmem:[#allocation2 + $0x78] sm:$0xff]
    %v61 = vld [vmem:[#allocation4] sm:$0x1]
    %v62 = vlaneseq
    %v63 = vshrl.u32 %v62, 7
    %v64 = vsub.s32 0, %v63
    %v65 = vrot.slane %v61, %v64
    %66 = vmatprep.subr.mxu0 0.0
    %67 = vmatpush1.msra.mxu0 %v45
    %68 = vmatprep.subr.mxu0 0.0
    %69 = vmatpush1.msra.mxu0 %v46
    %70 = vmatprep.subr.mxu0 0.0
    %71 = vmatpush1.msra.mxu0 %v47
    %72 = vmatprep.subr.mxu0 0.0
    %73 = vmatpush1.msra.mxu0 %v48
    %74 = vmatprep.subr.mxu0 0.0
    %75 = vmatpush1.msra.mxu0 %v49
    %76 = vmatprep.subr.mxu0 0.0
    %77 = vmatpush1.msra.mxu0 %v50
    %78 = vmatprep.subr.mxu0 0.0
    %79 = vmatpush1.msra.mxu0 %v51
    %80 = vmatprep.subr.mxu0 0.0
    %81 = vmatpush1.msra.mxu0 %v52
    %82 = vmatprep.subr.mxu0 0.0
    %83 = vmatpush1.msra.mxu0 %v53
    %84 = vmatprep.subr.mxu0 0.0
    %85 = vmatpush1.msra.mxu0 %v54
    %86 = vmatprep.subr.mxu0 0.0
    %87 = vmatpush1.msra.mxu0 %v55
    %88 = vmatprep.subr.mxu0 0.0
    %89 = vmatpush1.msra.mxu0 %v56
    %90 = vmatprep.subr.mxu0 0.0
    %91 = vmatpush1.msra.mxu0 %v57
    %92 = vmatprep.subr.mxu0 0.0
    %93 = vmatpush1.msra.mxu0 %v58
    %94 = vmatprep.subr.mxu0 0.0
    %95 = vmatpush1.msra.mxu0 %v59
    %96 = vmatprep.subr.mxu0 0.0
    %97 = vmatpush1.msra.mxu0 %v60
    %98 = vmatprep.subr.mxu0 0.0
    %99 = vmatpush1.msra.mxu0 0.0
    %100 = vmatprep.subr.mxu0 0.0
    %101 = vmatpush1.msra.mxu0 0.0
    %102 = vmatprep.subr.mxu0 0.0
    %103 = vmatpush1.msra.mxu0 0.0
    %104 = vmatprep.subr.mxu0 0.0
    %105 = vmatpush1.msra.mxu0 0.0
    %106 = vmatprep.subr.mxu0 0.0
    %107 = vmatpush1.msra.mxu0 0.0
    %108 = vmatprep.subr.mxu0 0.0
    %109 = vmatpush1.msra.mxu0 0.0
    %110 = vmatprep.subr.mxu0 0.0
    %111 = vmatpush1.msra.mxu0 0.0
    %112 = vmatprep.subr.mxu0 0.0
    %113 = vmatpush1.msra.mxu0 0.0
    %114 = vmatprep.subr.mxu0 0.0
    %115 = vmatpush1.msra.mxu0 0.0
    %116 = vmatprep.subr.mxu0 0.0
    %117 = vmatpush1.msra.mxu0 0.0
    %118 = vmatprep.subr.mxu0 0.0
    %119 = vmatpush1.msra.mxu0 0.0
    %120 = vmatprep.subr.mxu0 0.0
    %121 = vmatpush1.msra.mxu0 0.0
    %122 = vmatprep.subr.mxu0 0.0
    %123 = vmatpush1.msra.mxu0 0.0
    %124 = vmatprep.subr.mxu0 0.0
    %125 = vmatpush1.msra.mxu0 0.0
    %126 = vmatprep.subr.mxu0 0.0
    %127 = vmatpush1.msra.mxu0 0.0
    %128 = vmatprep.subr.mxu0 0.0
    %129 = vmatpush1.msra.mxu0 0.0
    %130 = vmatprep.mubr.f32.mxu0 0.0
    %131 = vmatmul.mubr.f32.gmra.mrb[0].mxu0 %v44
    %v132 = vpop.f32.mrb[0].mxu0
    %v133 = vadd.f32 %v65, %v132
    %v134 = vpop.f32.mrb[0].mxu0
    %135 = vdwg.mxu0
    %v136 = vmax.f32 %v133, 0.0
    %v137 = vmul.f32 %v136, %v136
    %138 = vadd.xlane.f32.xlu0 %v137
    %v139 = vpop.xlane.xlu0 %138
    %v140 = vmul.f32 %v139, 0.015625
    %v141 = vmul.f32 %v137, %v137
    %142 = vadd.xlane.f32.xlu0 %v141
    %v143 = vpop.xlane.xlu0 %142
    %v144 = vmul.f32 %v143, 0.015625
    %v145 = vmul.f32 %v140, %v140
    %v146 = vsub.f32 %v144, %v145
    %v147 = vsub.f32 %v137, %v140
    %v148 = vadd.f32 %v146, 1e-05
    %v149 = vrsqrt.pop %v148
    %v150 = vmul.f32 %v147, %v149
    %v151 = vld [vmem:[#allocation4 + $0x1] sm:$0x1]
    %v152 = vlaneseq
    %v153 = vshrl.u32 %v152, 7
    %v154 = vsub.s32 0, %v153
    %v155 = vrot.slane %v151, %v154
    %v156 = vmul.f32 %v150, %v155
    %v157 = vld [vmem:[#allocation2 + $0x80] sm:$0xff]
    %v158 = vld [vmem:[#allocation2 + $0x88] sm:$0xff]
    %v159 = vld [vmem:[#allocation2 + $0x90] sm:$0xff]
    %v160 = vld [vmem:[#allocation2 + $0x98] sm:$0xff]
    %v161 = vld [vmem:[#allocation2 + $0xa0] sm:$0xff]
    %v162 = vld [vmem:[#allocation2 + $0xa8] sm:$0xff]
    %v163 = vld [vmem:[#allocation2 + $0xb0] sm:$0xff]
    %v164 = vld [vmem:[#allocation2 + $0xb8] sm:$0xff]
    %v165 = vld [vmem:[#allocation2 + $0xc0] sm:$0xff]
    %v166 = vld [vmem:[#allocation2 + $0xc8] sm:$0xff]
    %v167 = vld [vmem:[#allocation2 + $0xd0] sm:$0xff]
    %v168 = vld [vmem:[#allocation2 + $0xd8] sm:$0xff]
    %v169 = vld [vmem:[#allocation2 + $0xe0] sm:$0xff]
    %v170 = vld [vmem:[#allocation2 + $0xe8] sm:$0xff]
    %v171 = vld [vmem:[#allocation2 + $0xf0] sm:$0xff]
    %v172 = vld [vmem:[#allocation2 + $0xf8] sm:$0xff]
    %v173 = vld [vmem:[#allocation4 + $0x2] sm:$0x1]
    %v174 = vlaneseq
    %v175 = vshrl.u32 %v174, 7
    %v176 = vsub.s32 0, %v175
    %v177 = vrot.slane %v173, %v176
    %178 = vmatprep.subr.mxu0 0.0
    %179 = vmatpush1.msra.mxu0 %v157
    %180 = vmatprep.subr.mxu0 0.0
    %181 = vmatpush1.msra.mxu0 %v158
    %182 = vmatprep.subr.mxu0 0.0
    %183 = vmatpush1.msra.mxu0 %v159
    %184 = vmatprep.subr.mxu0 0.0
    %185 = vmatpush1.msra.mxu0 %v160
    %186 = vmatprep.subr.mxu0 0.0
    %187 = vmatpush1.msra.mxu0 %v161
    %188 = vmatprep.subr.mxu0 0.0
    %189 = vmatpush1.msra.mxu0 %v162
    %190 = vmatprep.subr.mxu0 0.0
    %191 = vmatpush1.msra.mxu0 %v163
    %192 = vmatprep.subr.mxu0 0.0
    %193 = vmatpush1.msra.mxu0 %v164
    %194 = vmatprep.subr.mxu0 0.0
    %195 = vmatpush1.msra.mxu0 %v165
    %196 = vmatprep.subr.mxu0 0.0
    %197 = vmatpush1.msra.mxu0 %v166
    %198 = vmatprep.subr.mxu0 0.0
    %199 = vmatpush1.msra.mxu0 %v167
    %200 = vmatprep.subr.mxu0 0.0
    %201 = vmatpush1.msra.mxu0 %v168
    %202 = vmatprep.subr.mxu0 0.0
    %203 = vmatpush1.msra.mxu0 %v169
    %204 = vmatprep.subr.mxu0 0.0
    %205 = vmatpush1.msra.mxu0 %v170
    %206 = vmatprep.subr.mxu0 0.0
    %207 = vmatpush1.msra.mxu0 %v171
    %208 = vmatprep.subr.mxu0 0.0
    %209 = vmatpush1.msra.mxu0 %v172
    %210 = vmatprep.subr.mxu0 0.0
    %211 = vmatpush1.msra.mxu0 0.0
    %212 = vmatprep.subr.mxu0 0.0
    %213 = vmatpush1.msra.mxu0 0.0
    %214 = vmatprep.subr.mxu0 0.0
    %215 = vmatpush1.msra.mxu0 0.0
    %216 = vmatprep.subr.mxu0 0.0
    %217 = vmatpush1.msra.mxu0 0.0
    %218 = vmatprep.subr.mxu0 0.0
    %219 = vmatpush1.msra.mxu0 0.0
    %220 = vmatprep.subr.mxu0 0.0
    %221 = vmatpush1.msra.mxu0 0.0
    %222 = vmatprep.subr.mxu0 0.0
    %223 = vmatpush1.msra.mxu0 0.0
    %224 = vmatprep.subr.mxu0 0.0
    %225 = vmatpush1.msra.mxu0 0.0
    %226 = vmatprep.subr.mxu0 0.0
    %227 = vmatpush1.msra.mxu0 0.0
    %228 = vmatprep.subr.mxu0 0.0
    %229 = vmatpush1.msra.mxu0 0.0
    %230 = vmatprep.subr.mxu0 0.0
    %231 = vmatpush1.msra.mxu0 0.0
    %232 = vmatprep.subr.mxu0 0.0
    %233 = vmatpush1.msra.mxu0 0.0
    %234 = vmatprep.subr.mxu0 0.0
    %235 = vmatpush1.msra.mxu0 0.0
    %236 = vmatprep.subr.mxu0 0.0
    %237 = vmatpush1.msra.mxu0 0.0
    %238 = vmatprep.subr.mxu0 0.0
    %239 = vmatpush1.msra.mxu0 0.0
    %240 = vmatprep.subr.mxu0 0.0
    %241 = vmatpush1.msra.mxu0 0.0
    %242 = vmatprep.mubr.f32.mxu0 0.0
    %243 = vmatmul.mubr.f32.gmra.mrb[0].mxu0 %v156
    %v244 = vpop.f32.mrb[0].mxu0
    %v245 = vadd.f32 %v177, %v244
    %v246 = vpop.f32.mrb[0].mxu0
    %247 = vdwg.mxu0
    %v248 = vmax.f32 %v245, 0.0
    %v249 = vmul.f32 %v248, %v248
    %250 = vadd.xlane.f32.xlu0 %v249
    %v251 = vpop.xlane.xlu0 %250
    %v252 = vmul.f32 %v251, 0.0078125
    %v253 = vmul.f32 %v249, %v249
    %254 = vadd.xlane.f32.xlu0 %v253
    %v255 = vpop.xlane.xlu0 %254
    %v256 = vmul.f32 %v255, 0.0078125
    %v257 = vmul.f32 %v252, %v252
    %v258 = vsub.f32 %v256, %v257
    %v259 = vsub.f32 %v249, %v252
    %v260 = vadd.f32 %v258, 1e-05
    %v261 = vrsqrt.pop %v260
    %v262 = vmul.f32 %v259, %v261
    %v263 = vld [vmem:[#allocation4 + $0x3] sm:$0x1]
    %v264 = vlaneseq
    %v265 = vshrl.u32 %v264, 7
    %v266 = vsub.s32 0, %v265
    %v267 = vrot.slane %v263, %v266
    %v268 = vmul.f32 %v262, %v267
    %v269 = vld [vmem:[#allocation2 + $0x100] sm:$0xff]
    %v270 = vld [vmem:[#allocation2 + $0x108] sm:$0xff]
    %v271 = vld [vmem:[#allocation2 + $0x110] sm:$0xff]
    %v272 = vld [vmem:[#allocation2 + $0x118] sm:$0xff]
    %v273 = vld [vmem:[#allocation2 + $0x120] sm:$0xff]
    %v274 = vld [vmem:[#allocation2 + $0x128] sm:$0xff]
    %v275 = vld [vmem:[#allocation2 + $0x130] sm:$0xff]
    %v276 = vld [vmem:[#allocation2 + $0x138] sm:$0xff]
    %v277 = vld [vmem:[#allocation2 + $0x140] sm:$0xff]
    %v278 = vld [vmem:[#allocation2 + $0x148] sm:$0xff]
    %v279 = vld [vmem:[#allocation2 + $0x150] sm:$0xff]
    %v280 = vld [vmem:[#allocation2 + $0x158] sm:$0xff]
    %v281 = vld [vmem:[#allocation2 + $0x160] sm:$0xff]
    %v282 = vld [vmem:[#allocation2 + $0x168] sm:$0xff]
    %v283 = vld [vmem:[#allocation2 + $0x170] sm:$0xff]
    %v284 = vld [vmem:[#allocation2 + $0x178] sm:$0xff]
    %v285 = vld [vmem:[#allocation4 + $0x4] sm:$0x1]
    %v286 = vlaneseq
    %v287 = vshrl.u32 %v286, 7
    %v288 = vsub.s32 0, %v287
    %v289 = vrot.slane %v285, %v288
    %290 = vmatprep.subr.mxu0 0.0
    %291 = vmatpush1.msra.mxu0 %v269
    %292 = vmatprep.subr.mxu0 0.0
    %293 = vmatpush1.msra.mxu0 %v270
    %294 = vmatprep.subr.mxu0 0.0
    %295 = vmatpush1.msra.mxu0 %v271
    %296 = vmatprep.subr.mxu0 0.0
    %297 = vmatpush1.msra.mxu0 %v272
    %298 = vmatprep.subr.mxu0 0.0
    %299 = vmatpush1.msra.mxu0 %v273
    %300 = vmatprep.subr.mxu0 0.0
    %301 = vmatpush1.msra.mxu0 %v274
    %302 = vmatprep.subr.mxu0 0.0
    %303 = vmatpush1.msra.mxu0 %v275
    %304 = vmatprep.subr.mxu0 0.0
    %305 = vmatpush1.msra.mxu0 %v276
    %306 = vmatprep.subr.mxu0 0.0
    %307 = vmatpush1.msra.mxu0 %v277
    %308 = vmatprep.subr.mxu0 0.0
    %309 = vmatpush1.msra.mxu0 %v278
    %310 = vmatprep.subr.mxu0 0.0
    %311 = vmatpush1.msra.mxu0 %v279
    %312 = vmatprep.subr.mxu0 0.0
    %313 = vmatpush1.msra.mxu0 %v280
    %314 = vmatprep.subr.mxu0 0.0
    %315 = vmatpush1.msra.mxu0 %v281
    %316 = vmatprep.subr.mxu0 0.0
    %317 = vmatpush1.msra.mxu0 %v282
    %318 = vmatprep.subr.mxu0 0.0
    %319 = vmatpush1.msra.mxu0 %v283
    %320 = vmatprep.subr.mxu0 0.0
    %321 = vmatpush1.msra.mxu0 %v284
    %322 = vmatprep.subr.mxu0 0.0
    %323 = vmatpush1.msra.mxu0 0.0
    %324 = vmatprep.subr.mxu0 0.0
    %325 = vmatpush1.msra.mxu0 0.0
    %326 = vmatprep.subr.mxu0 0.0
    %327 = vmatpush1.msra.mxu0 0.0
    %328 = vmatprep.subr.mxu0 0.0
    %329 = vmatpush1.msra.mxu0 0.0
    %330 = vmatprep.subr.mxu0 0.0
    %331 = vmatpush1.msra.mxu0 0.0
    %332 = vmatprep.subr.mxu0 0.0
    %333 = vmatpush1.msra.mxu0 0.0
    %334 = vmatprep.subr.mxu0 0.0
    %335 = vmatpush1.msra.mxu0 0.0
    %336 = vmatprep.subr.mxu0 0.0
    %337 = vmatpush1.msra.mxu0 0.0
    %338 = vmatprep.subr.mxu0 0.0
    %339 = vmatpush1.msra.mxu0 0.0
    %340 = vmatprep.subr.mxu0 0.0
    %341 = vmatpush1.msra.mxu0 0.0
    %342 = vmatprep.subr.mxu0 0.0
    %343 = vmatpush1.msra.mxu0 0.0
    %344 = vmatprep.subr.mxu0 0.0
    %345 = vmatpush1.msra.mxu0 0.0
    %346 = vmatprep.subr.mxu0 0.0
    %347 = vmatpush1.msra.mxu0 0.0
    %348 = vmatprep.subr.mxu0 0.0
    %349 = vmatpush1.msra.mxu0 0.0
    %350 = vmatprep.subr.mxu0 0.0
    %351 = vmatpush1.msra.mxu0 0.0
    %352 = vmatprep.subr.mxu0 0.0
    %353 = vmatpush1.msra.mxu0 0.0
    %354 = vmatprep.mubr.f32.mxu0 0.0
    %355 = vmatmul.mubr.f32.gmra.mrb[0].mxu0 %v268
    %v356 = vpop.f32.mrb[0].mxu0
    %v357 = vadd.f32 %v289, %v356
    %v358 = vpop.f32.mrb[0].mxu0
    %359 = vdwg.mxu0
    %360 = vadd.xlane.f32.xlu0 %v357
    %v361 = vpop.xlane.xlu0 %360
    %v362 = vmul.f32 %v361, 0.015625
    %v363 = vmul.f32 %v357, %v357
    %364 = vadd.xlane.f32.xlu0 %v363
    %v365 = vpop.xlane.xlu0 %364
    %v366 = vmul.f32 %v365, 0.015625
    %v367 = vmul.f32 %v362, %v362
    %v368 = vsub.f32 %v366, %v367
    %v369 = vsub.f32 %v357, %v362
    %v370 = vadd.f32 %v368, 1e-05
    %v371 = vrsqrt.pop %v370
    %v372 = vmul.f32 %v369, %v371
    %v373 = vld [vmem:[#allocation4 + $0x5] sm:$0x1]
    %v374 = vlaneseq
    %v375 = vshrl.u32 %v374, 7
    %v376 = vsub.s32 0, %v375
    %v377 = vrot.slane %v373, %v376
    %v378 = vmul.f32 %v372, %v377
    %v379 = vld [vmem:[#allocation4 + $0x6] sm:$0x1]
    %v380 = vlaneseq
    %v381 = vshrl.u32 %v380, 7
    %v382 = vsub.s32 0, %v381
    %v383 = vrot.slane %v379, %v382
    %v384 = vmul.f32 %v156, %v383
    %v385 = vadd.f32 %v384, %v378
    %v386 = vld [vmem:[#allocation2 + $0x180] sm:$0xff]
    %v387 = vld [vmem:[#allocation2 + $0x188] sm:$0xff]
    %v388 = vld [vmem:[#allocation2 + $0x190] sm:$0xff]
    %v389 = vld [vmem:[#allocation2 + $0x198] sm:$0xff]
    %v390 = vld [vmem:[#allocation2 + $0x1a0] sm:$0xff]
    %v391 = vld [vmem:[#allocation2 + $0x1a8] sm:$0xff]
    %v392 = vld [vmem:[#allocation2 + $0x1b0] sm:$0xff]
    %v393 = vld [vmem:[#allocation2 + $0x1b8] sm:$0xff]
    %v394 = vld [vmem:[#allocation2 + $0x1c0] sm:$0xff]
    %v395 = vld [vmem:[#allocation2 + $0x1c8] sm:$0xff]
    %v396 = vld [vmem:[#allocation2 + $0x1d0] sm:$0xff]
    %v397 = vld [vmem:[#allocation2 + $0x1d8] sm:$0xff]
    %v398 = vld [vmem:[#allocation2 + $0x1e0] sm:$0xff]
    %v399 = vld [vmem:[#allocation2 + $0x1e8] sm:$0xff]
    %v400 = vld [vmem:[#allocation2 + $0x1f0] sm:$0xff]
    %v401 = vld [vmem:[#allocation2 + $0x1f8] sm:$0xff]
    %v402 = vld [vmem:[#allocation4 + $0x7] sm:$0x1]
    %v403 = vlaneseq
    %v404 = vshrl.u32 %v403, 7
    %v405 = vsub.s32 0, %v404
    %v406 = vrot.slane %v402, %v405
    %407 = vmatprep.subr.mxu0 0.0
    %408 = vmatpush1.msra.mxu0 %v386
    %409 = vmatprep.subr.mxu0 0.0
    %410 = vmatpush1.msra.mxu0 %v387
    %411 = vmatprep.subr.mxu0 0.0
    %412 = vmatpush1.msra.mxu0 %v388
    %413 = vmatprep.subr.mxu0 0.0
    %414 = vmatpush1.msra.mxu0 %v389
    %415 = vmatprep.subr.mxu0 0.0
    %416 = vmatpush1.msra.mxu0 %v390
    %417 = vmatprep.subr.mxu0 0.0
    %418 = vmatpush1.msra.mxu0 %v391
    %419 = vmatprep.subr.mxu0 0.0
    %420 = vmatpush1.msra.mxu0 %v392
    %421 = vmatprep.subr.mxu0 0.0
    %422 = vmatpush1.msra.mxu0 %v393
    %423 = vmatprep.subr.mxu0 0.0
    %424 = vmatpush1.msra.mxu0 %v394
    %425 = vmatprep.subr.mxu0 0.0
    %426 = vmatpush1.msra.mxu0 %v395
    %427 = vmatprep.subr.mxu0 0.0
    %428 = vmatpush1.msra.mxu0 %v396
    %429 = vmatprep.subr.mxu0 0.0
    %430 = vmatpush1.msra.mxu0 %v397
    %431 = vmatprep.subr.mxu0 0.0
    %432 = vmatpush1.msra.mxu0 %v398
    %433 = vmatprep.subr.mxu0 0.0
    %434 = vmatpush1.msra.mxu0 %v399
    %435 = vmatprep.subr.mxu0 0.0
    %436 = vmatpush1.msra.mxu0 %v400
    %437 = vmatprep.subr.mxu0 0.0
    %438 = vmatpush1.msra.mxu0 %v401
    %439 = vmatprep.subr.mxu0 0.0
    %440 = vmatpush1.msra.mxu0 0.0
    %441 = vmatprep.subr.mxu0 0.0
    %442 = vmatpush1.msra.mxu0 0.0
    %443 = vmatprep.subr.mxu0 0.0
    %444 = vmatpush1.msra.mxu0 0.0
    %445 = vmatprep.subr.mxu0 0.0
    %446 = vmatpush1.msra.mxu0 0.0
    %447 = vmatprep.subr.mxu0 0.0
    %448 = vmatpush1.msra.mxu0 0.0
    %449 = vmatprep.subr.mxu0 0.0
    %450 = vmatpush1.msra.mxu0 0.0
    %451 = vmatprep.subr.mxu0 0.0
    %452 = vmatpush1.msra.mxu0 0.0
    %453 = vmatprep.subr.mxu0 0.0
    %454 = vmatpush1.msra.mxu0 0.0
    %455 = vmatprep.subr.mxu0 0.0
    %456 = vmatpush1.msra.mxu0 0.0
    %457 = vmatprep.subr.mxu0 0.0
    %458 = vmatpush1.msra.mxu0 0.0
    %459 = vmatprep.subr.mxu0 0.0
    %460 = vmatpush1.msra.mxu0 0.0
    %461 = vmatprep.subr.mxu0 0.0
    %462 = vmatpush1.msra.mxu0 0.0
    %463 = vmatprep.subr.mxu0 0.0
    %464 = vmatpush1.msra.mxu0 0.0
    %465 = vmatprep.subr.mxu0 0.0
    %466 = vmatpush1.msra.mxu0 0.0
    %467 = vmatprep.subr.mxu0 0.0
    %468 = vmatpush1.msra.mxu0 0.0
    %469 = vmatprep.subr.mxu0 0.0
    %470 = vmatpush1.msra.mxu0 0.0
    %471 = vmatprep.mubr.f32.mxu0 0.0
    %472 = vmatmul.mubr.f32.gmra.mrb[0].mxu0 %v385
    %v473 = vpop.f32.mrb[0].mxu0
    %v474 = vadd.f32 %v406, %v473
    %v475 = vpop.f32.mrb[0].mxu0
    %476 = vdwg.mxu0
    %v477 = vmax.f32 %v474, 0.0
    %v478 = vmul.f32 %v477, %v477
    %479 = vadd.xlane.f32.xlu0 %v478
    %v480 = vpop.xlane.xlu0 %479
    %v481 = vmul.f32 %v480, 0.0078125
    %v482 = vmul.f32 %v478, %v478
    %483 = vadd.xlane.f32.xlu0 %v482
    %v484 = vpop.xlane.xlu0 %483
    %v485 = vmul.f32 %v484, 0.0078125
    %v486 = vmul.f32 %v481, %v481
    %v487 = vsub.f32 %v485, %v486
    %v488 = vsub.f32 %v478, %v481
    %v489 = vadd.f32 %v487, 1e-05
    %v490 = vrsqrt.pop %v489
    %v491 = vmul.f32 %v488, %v490
    %v492 = vld [vmem:[#allocation4 + $0x8] sm:$0x1]
    %v493 = vlaneseq
    %v494 = vshrl.u32 %v493, 7
    %v495 = vsub.s32 0, %v494
    %v496 = vrot.slane %v492, %v495
    %v497 = vmul.f32 %v491, %v496
    %v498 = vld [vmem:[#allocation2 + $0x200] sm:$0xff]
    %v499 = vld [vmem:[#allocation2 + $0x208] sm:$0xff]
    %v500 = vld [vmem:[#allocation2 + $0x210] sm:$0xff]
    %v501 = vld [vmem:[#allocation2 + $0x218] sm:$0xff]
    %v502 = vld [vmem:[#allocation2 + $0x220] sm:$0xff]
    %v503 = vld [vmem:[#allocation2 + $0x228] sm:$0xff]
    %v504 = vld [vmem:[#allocation2 + $0x230] sm:$0xff]
    %v505 = vld [vmem:[#allocation2 + $0x238] sm:$0xff]
    %v506 = vld [vmem:[#allocation2 + $0x240] sm:$0xff]
    %v507 = vld [vmem:[#allocation2 + $0x248] sm:$0xff]
    %v508 = vld [vmem:[#allocation2 + $0x250] sm:$0xff]
    %v509 = vld [vmem:[#allocation2 + $0x258] sm:$0xff]
    %v510 = vld [vmem:[#allocation2 + $0x260] sm:$0xff]
    %v511 = vld [vmem:[#allocation2 + $0x268] sm:$0xff]
    %v512 = vld [vmem:[#allocation2 + $0x270] sm:$0xff]
    %v513 = vld [vmem:[#allocation2 + $0x278] sm:$0xff]
    %v514 = vld [vmem:[#allocation4 + $0x9] sm:$0x1]
    %v515 = vlaneseq
    %v516 = vshrl.u32 %v515, 7
    %v517 = vsub.s32 0, %v516
    %v518 = vrot.slane %v514, %v517
    %519 = vmatprep.subr.mxu0 0.0
    %520 = vmatpush1.msra.mxu0 %v498
    %521 = vmatprep.subr.mxu0 0.0
    %522 = vmatpush1.msra.mxu0 %v499
    %523 = vmatprep.subr.mxu0 0.0
    %524 = vmatpush1.msra.mxu0 %v500
    %525 = vmatprep.subr.mxu0 0.0
    %526 = vmatpush1.msra.mxu0 %v501
    %527 = vmatprep.subr.mxu0 0.0
    %528 = vmatpush1.msra.mxu0 %v502
    %529 = vmatprep.subr.mxu0 0.0
    %530 = vmatpush1.msra.mxu0 %v503
    %531 = vmatprep.subr.mxu0 0.0
    %532 = vmatpush1.msra.mxu0 %v504
    %533 = vmatprep.subr.mxu0 0.0
    %534 = vmatpush1.msra.mxu0 %v505
    %535 = vmatprep.subr.mxu0 0.0
    %536 = vmatpush1.msra.mxu0 %v506
    %537 = vmatprep.subr.mxu0 0.0
    %538 = vmatpush1.msra.mxu0 %v507
    %539 = vmatprep.subr.mxu0 0.0
    %540 = vmatpush1.msra.mxu0 %v508
    %541 = vmatprep.subr.mxu0 0.0
    %542 = vmatpush1.msra.mxu0 %v509
    %543 = vmatprep.subr.mxu0 0.0
    %544 = vmatpush1.msra.mxu0 %v510
    %545 = vmatprep.subr.mxu0 0.0
    %546 = vmatpush1.msra.mxu0 %v511
    %547 = vmatprep.subr.mxu0 0.0
    %548 = vmatpush1.msra.mxu0 %v512
    %549 = vmatprep.subr.mxu0 0.0
    %550 = vmatpush1.msra.mxu0 %v513
    %551 = vmatprep.subr.mxu0 0.0
    %552 = vmatpush1.msra.mxu0 0.0
    %553 = vmatprep.subr.mxu0 0.0
    %554 = vmatpush1.msra.mxu0 0.0
    %555 = vmatprep.subr.mxu0 0.0
    %556 = vmatpush1.msra.mxu0 0.0
    %557 = vmatprep.subr.mxu0 0.0
    %558 = vmatpush1.msra.mxu0 0.0
    %559 = vmatprep.subr.mxu0 0.0
    %560 = vmatpush1.msra.mxu0 0.0
    %561 = vmatprep.subr.mxu0 0.0
    %562 = vmatpush1.msra.mxu0 0.0
    %563 = vmatprep.subr.mxu0 0.0
    %564 = vmatpush1.msra.mxu0 0.0
    %565 = vmatprep.subr.mxu0 0.0
    %566 = vmatpush1.msra.mxu0 0.0
    %567 = vmatprep.subr.mxu0 0.0
    %568 = vmatpush1.msra.mxu0 0.0
    %569 = vmatprep.subr.mxu0 0.0
    %570 = vmatpush1.msra.mxu0 0.0
    %571 = vmatprep.subr.mxu0 0.0
    %572 = vmatpush1.msra.mxu0 0.0
    %573 = vmatprep.subr.mxu0 0.0
    %574 = vmatpush1.msra.mxu0 0.0
    %575 = vmatprep.subr.mxu0 0.0
    %576 = vmatpush1.msra.mxu0 0.0
    %577 = vmatprep.subr.mxu0 0.0
    %578 = vmatpush1.msra.mxu0 0.0
    %579 = vmatprep.subr.mxu0 0.0
    %580 = vmatpush1.msra.mxu0 0.0
    %581 = vmatprep.subr.mxu0 0.0
    %582 = vmatpush1.msra.mxu0 0.0
    %583 = vmatprep.mubr.f32.mxu0 0.0
    %584 = vmatmul.mubr.f32.gmra.mrb[0].mxu0 %v497
    %v585 = vpop.f32.mrb[0].mxu0
    %v586 = vadd.f32 %v518, %v585
    %v587 = vpop.f32.mrb[0].mxu0
    %588 = vdwg.mxu0
    %589 = vadd.xlane.f32.xlu0 %v586
    %v590 = vpop.xlane.xlu0 %589
    %v591 = vmul.f32 %v590, 0.015625
    %v592 = vmul.f32 %v586, %v586
    %593 = vadd.xlane.f32.xlu0 %v592
    %v594 = vpop.xlane.xlu0 %593
    %v595 = vmul.f32 %v594, 0.015625
    %v596 = vmul.f32 %v591, %v591
    %v597 = vsub.f32 %v595, %v596
    %v598 = vsub.f32 %v586, %v591
    %v599 = vadd.f32 %v597, 1e-05
    %v600 = vrsqrt.pop %v599
    %v601 = vmul.f32 %v598, %v600
    %v602 = vld [vmem:[#allocation4 + $0xa] sm:$0x1]
    %v603 = vlaneseq
    %v604 = vshrl.u32 %v603, 7
    %v605 = vsub.s32 0, %v604
    %v606 = vrot.slane %v602, %v605
    %v607 = vmul.f32 %v601, %v606
    %v608 = vld [vmem:[#allocation4 + $0xb] sm:$0x1]
    %v609 = vlaneseq
    %v610 = vshrl.u32 %v609, 7
    %v611 = vsub.s32 0, %v610
    %v612 = vrot.slane %v608, %v611
    %v613 = vmul.f32 %v385, %v612
    %v614 = vadd.f32 %v613, %v607
    %v615 = vld [vmem:[#allocation2 + $0x280] sm:$0xff]
    %v616 = vld [vmem:[#allocation2 + $0x288] sm:$0xff]
    %v617 = vld [vmem:[#allocation2 + $0x290] sm:$0xff]
    %v618 = vld [vmem:[#allocation2 + $0x298] sm:$0xff]
    %v619 = vld [vmem:[#allocation2 + $0x2a0] sm:$0xff]
    %v620 = vld [vmem:[#allocation2 + $0x2a8] sm:$0xff]
    %v621 = vld [vmem:[#allocation2 + $0x2b0] sm:$0xff]
    %v622 = vld [vmem:[#allocation2 + $0x2b8] sm:$0xff]
    %v623 = vld [vmem:[#allocation2 + $0x2c0] sm:$0xff]
    %v624 = vld [vmem:[#allocation2 + $0x2c8] sm:$0xff]
    %v625 = vld [vmem:[#allocation2 + $0x2d0] sm:$0xff]
    %v626 = vld [vmem:[#allocation2 + $0x2d8] sm:$0xff]
    %v627 = vld [vmem:[#allocation2 + $0x2e0] sm:$0xff]
    %v628 = vld [vmem:[#allocation2 + $0x2e8] sm:$0xff]
    %v629 = vld [vmem:[#allocation2 + $0x2f0] sm:$0xff]
    %v630 = vld [vmem:[#allocation2 + $0x2f8] sm:$0xff]
    %v631 = vld [vmem:[#allocation4 + $0xc] sm:$0x1]
    %v632 = vlaneseq
    %v633 = vshrl.u32 %v632, 7
    %v634 = vsub.s32 0, %v633
    %v635 = vrot.slane %v631, %v634
    %636 = vmatprep.subr.mxu0 0.0
    %637 = vmatpush1.msra.mxu0 %v615
    %638 = vmatprep.subr.mxu0 0.0
    %639 = vmatpush1.msra.mxu0 %v616
    %640 = vmatprep.subr.mxu0 0.0
    %641 = vmatpush1.msra.mxu0 %v617
    %642 = vmatprep.subr.mxu0 0.0
    %643 = vmatpush1.msra.mxu0 %v618
    %644 = vmatprep.subr.mxu0 0.0
    %645 = vmatpush1.msra.mxu0 %v619
    %646 = vmatprep.subr.mxu0 0.0
    %647 = vmatpush1.msra.mxu0 %v620
    %648 = vmatprep.subr.mxu0 0.0
    %649 = vmatpush1.msra.mxu0 %v621
    %650 = vmatprep.subr.mxu0 0.0
    %651 = vmatpush1.msra.mxu0 %v622
    %652 = vmatprep.subr.mxu0 0.0
    %653 = vmatpush1.msra.mxu0 %v623
    %654 = vmatprep.subr.mxu0 0.0
    %655 = vmatpush1.msra.mxu0 %v624
    %656 = vmatprep.subr.mxu0 0.0
    %657 = vmatpush1.msra.mxu0 %v625
    %658 = vmatprep.subr.mxu0 0.0
    %659 = vmatpush1.msra.mxu0 %v626
    %660 = vmatprep.subr.mxu0 0.0
    %661 = vmatpush1.msra.mxu0 %v627
    %662 = vmatprep.subr.mxu0 0.0
    %663 = vmatpush1.msra.mxu0 %v628
    %664 = vmatprep.subr.mxu0 0.0
    %665 = vmatpush1.msra.mxu0 %v629
    %666 = vmatprep.subr.mxu0 0.0
    %667 = vmatpush1.msra.mxu0 %v630
    %668 = vmatprep.subr.mxu0 0.0
    %669 = vmatpush1.msra.mxu0 0.0
    %670 = vmatprep.subr.mxu0 0.0
    %671 = vmatpush1.msra.mxu0 0.0
    %672 = vmatprep.subr.mxu0 0.0
    %673 = vmatpush1.msra.mxu0 0.0
    %674 = vmatprep.subr.mxu0 0.0
    %675 = vmatpush1.msra.mxu0 0.0
    %676 = vmatprep.subr.mxu0 0.0
    %677 = vmatpush1.msra.mxu0 0.0
    %678 = vmatprep.subr.mxu0 0.0
    %679 = vmatpush1.msra.mxu0 0.0
    %680 = vmatprep.subr.mxu0 0.0
    %681 = vmatpush1.msra.mxu0 0.0
    %682 = vmatprep.subr.mxu0 0.0
    %683 = vmatpush1.msra.mxu0 0.0
    %684 = vmatprep.subr.mxu0 0.0
    %685 = vmatpush1.msra.mxu0 0.0
    %686 = vmatprep.subr.mxu0 0.0
    %687 = vmatpush1.msra.mxu0 0.0
    %688 = vmatprep.subr.mxu0 0.0
    %689 = vmatpush1.msra.mxu0 0.0
    %690 = vmatprep.subr.mxu0 0.0
    %691 = vmatpush1.msra.mxu0 0.0
    %692 = vmatprep.subr.mxu0 0.0
    %693 = vmatpush1.msra.mxu0 0.0
    %694 = vmatprep.subr.mxu0 0.0
    %695 = vmatpush1.msra.mxu0 0.0
    %696 = vmatprep.subr.mxu0 0.0
    %697 = vmatpush1.msra.mxu0 0.0
    %698 = vmatprep.subr.mxu0 0.0
    %699 = vmatpush1.msra.mxu0 0.0
    %700 = vmatprep.mubr.f32.mxu0 0.0
    %701 = vmatmul.mubr.f32.gmra.mrb[0].mxu0 %v614
    %v702 = vpop.f32.mrb[0].mxu0
    %v703 = vadd.f32 %v635, %v702
    %v704 = vpop.f32.mrb[0].mxu0
    %705 = vdwg.mxu0
    %v706 = vld [vmem:[#allocation2 + $0x300] sm:$0xff]
    %v707 = vld [vmem:[#allocation2 + $0x308] sm:$0xff]
    %v708 = vld [vmem:[#allocation2 + $0x310] sm:$0xff]
    %v709 = vld [vmem:[#allocation2 + $0x318] sm:$0xff]
    %v710 = vld [vmem:[#allocation2 + $0x320] sm:$0xff]
    %v711 = vld [vmem:[#allocation2 + $0x328] sm:$0xff]
    %v712 = vld [vmem:[#allocation2 + $0x330] sm:$0xff]
    %v713 = vld [vmem:[#allocation2 + $0x338] sm:$0xff]
    %v714 = vld [vmem:[#allocation2 + $0x340] sm:$0xff]
    %v715 = vld [vmem:[#allocation2 + $0x348] sm:$0xff]
    %v716 = vld [vmem:[#allocation2 + $0x350] sm:$0xff]
    %v717 = vld [vmem:[#allocation2 + $0x358] sm:$0xff]
    %v718 = vld [vmem:[#allocation2 + $0x360] sm:$0xff]
    %v719 = vld [vmem:[#allocation2 + $0x368] sm:$0xff]
    %v720 = vld [vmem:[#allocation2 + $0x370] sm:$0xff]
    %v721 = vld [vmem:[#allocation2 + $0x378] sm:$0xff]
    %v722 = vld [vmem:[#allocation4 + $0xd] sm:$0x1]
    %v723 = vlaneseq
    %v724 = vshrl.u32 %v723, 7
    %v725 = vsub.s32 0, %v724
    %v726 = vrot.slane %v722, %v725
    %727 = vmatprep.subr.mxu0 0.0
    %728 = vmatpush1.msra.mxu0 %v706
    %729 = vmatprep.subr.mxu0 0.0
    %730 = vmatpush1.msra.mxu0 %v707
    %731 = vmatprep.subr.mxu0 0.0
    %732 = vmatpush1.msra.mxu0 %v708
    %733 = vmatprep.subr.mxu0 0.0
    %734 = vmatpush1.msra.mxu0 %v709
    %735 = vmatprep.subr.mxu0 0.0
    %736 = vmatpush1.msra.mxu0 %v710
    %737 = vmatprep.subr.mxu0 0.0
    %738 = vmatpush1.msra.mxu0 %v711
    %739 = vmatprep.subr.mxu0 0.0
    %740 = vmatpush1.msra.mxu0 %v712
    %741 = vmatprep.subr.mxu0 0.0
    %742 = vmatpush1.msra.mxu0 %v713
    %743 = vmatprep.subr.mxu0 0.0
    %744 = vmatpush1.msra.mxu0 %v714
    %745 = vmatprep.subr.mxu0 0.0
    %746 = vmatpush1.msra.mxu0 %v715
    %747 = vmatprep.subr.mxu0 0.0
    %748 = vmatpush1.msra.mxu0 %v716
    %749 = vmatprep.subr.mxu0 0.0
    %750 = vmatpush1.msra.mxu0 %v717
    %751 = vmatprep.subr.mxu0 0.0
    %752 = vmatpush1.msra.mxu0 %v718
    %753 = vmatprep.subr.mxu0 0.0
    %754 = vmatpush1.msra.mxu0 %v719
    %755 = vmatprep.subr.mxu0 0.0
    %756 = vmatpush1.msra.mxu0 %v720
    %757 = vmatprep.subr.mxu0 0.0
    %758 = vmatpush1.msra.mxu0 %v721
    %759 = vmatprep.subr.mxu0 0.0
    %760 = vmatpush1.msra.mxu0 0.0
    %761 = vmatprep.subr.mxu0 0.0
    %762 = vmatpush1.msra.mxu0 0.0
    %763 = vmatprep.subr.mxu0 0.0
    %764 = vmatpush1.msra.mxu0 0.0
    %765 = vmatprep.subr.mxu0 0.0
    %766 = vmatpush1.msra.mxu0 0.0
    %767 = vmatprep.subr.mxu0 0.0
    %768 = vmatpush1.msra.mxu0 0.0
    %769 = vmatprep.subr.mxu0 0.0
    %770 = vmatpush1.msra.mxu0 0.0
    %771 = vmatprep.subr.mxu0 0.0
    %772 = vmatpush1.msra.mxu0 0.0
    %773 = vmatprep.subr.mxu0 0.0
    %774 = vmatpush1.msra.mxu0 0.0
    %775 = vmatprep.subr.mxu0 0.0
    %776 = vmatpush1.msra.mxu0 0.0
    %777 = vmatprep.subr.mxu0 0.0
    %778 = vmatpush1.msra.mxu0 0.0
    %779 = vmatprep.subr.mxu0 0.0
    %780 = vmatpush1.msra.mxu0 0.0
    %781 = vmatprep.subr.mxu0 0.0
    %782 = vmatpush1.msra.mxu0 0.0
    %783 = vmatprep.subr.mxu0 0.0
    %784 = vmatpush1.msra.mxu0 0.0
    %785 = vmatprep.subr.mxu0 0.0
    %786 = vmatpush1.msra.mxu0 0.0
    %787 = vmatprep.subr.mxu0 0.0
    %788 = vmatpush1.msra.mxu0 0.0
    %789 = vmatprep.subr.mxu0 0.0
    %790 = vmatpush1.msra.mxu0 0.0
    %791 = vmatprep.mubr.f32.mxu0 0.0
    %792 = vmatmul.mubr.f32.gmra.mrb[0].mxu0 %v703
    %v793 = vpop.f32.mrb[0].mxu0
    %v794 = vadd.f32 %v726, %v793
    %v795 = vpop.f32.mrb[0].mxu0
    %796 = vdwg.mxu0
    %v797 = vmax.f32 %v794, 0.0
    %v798 = vmul.f32 %v797, %v797
    %vm799 = vcmp.lt.s32.totalorder %v43, 64
    %v800 = vsel %vm799, %v798, 0.0
    %801 = vadd.xlane.f32.xlu0 %v800
    %v802 = vpop.xlane.xlu0 %801
    %v803 = vmul.f32 %v802, 0.015625
    %v804 = vmul.f32 %v800, %v800
    %805 = vadd.xlane.f32.xlu0 %v804
    %v806 = vpop.xlane.xlu0 %805
    %v807 = vmul.f32 %v806, 0.015625
    %v808 = vmul.f32 %v803, %v803
    %v809 = vsub.f32 %v807, %v808
    %v810 = vsub.f32 %v800, %v803
    %v811 = vadd.f32 %v809, 1e-05
    %v812 = vrsqrt.pop %v811
    %v813 = vmul.f32 %v810, %v812
    %v814 = vld [vmem:[#allocation4 + $0xe] sm:$0x1]
    %v815 = vlaneseq
    %v816 = vshrl.u32 %v815, 7
    %v817 = vsub.s32 0, %v816
    %v818 = vrot.slane %v814, %v817
    %v819 = vmul.f32 %v813, %v818
    %vm820 = vcmp.ge.s32.totalorder %v43, 64
    %vm821 = vcmp.lt.s32.totalorder %v43, 128
    %vm822 = vmand %vm820, %vm821
    %v823 = vsel %vm822, %v798, 0.0
    %824 = vadd.xlane.f32.xlu0 %v823
    %v825 = vpop.xlane.xlu0 %824
    %v826 = vmul.f32 %v825, 0.015625
    %v827 = vmul.f32 %v823, %v823
    %828 = vadd.xlane.f32.xlu0 %v827
    %v829 = vpop.xlane.xlu0 %828
    %v830 = vmul.f32 %v829, 0.015625
    %v831 = vmul.f32 %v826, %v826
    %v832 = vsub.f32 %v830, %v831
    %v833 = vsub.f32 %v823, %v826
    %v834 = vadd.f32 %v832, 1e-05
    %v835 = vrsqrt.pop %v834
    %v836 = vmul.f32 %v833, %v835
    %v837 = vld [vmem:[#allocation4 + $0xf] sm:$0x1]
    %v838 = vlaneseq
    %v839 = vshrl.u32 %v838, 7
    %v840 = vsub.s32 0, %v839
    %v841 = vrot.slane %v837, %v840
    %v842 = vmul.f32 %v836, %v841
    %v843 = vld [vmem:[#allocation2 + $0x380] sm:$0xff]
    %v844 = vld [vmem:[#allocation2 + $0x388] sm:$0xff]
    %v845 = vld [vmem:[#allocation2 + $0x390] sm:$0xff]
    %v846 = vld [vmem:[#allocation2 + $0x398] sm:$0xff]
    %v847 = vld [vmem:[#allocation2 + $0x3a0] sm:$0xff]
    %v848 = vld [vmem:[#allocation2 + $0x3a8] sm:$0xff]
    %v849 = vld [vmem:[#allocation2 + $0x3b0] sm:$0xff]
    %v850 = vld [vmem:[#allocation2 + $0x3b8] sm:$0xff]
    %v851 = vld [vmem:[#allocation2 + $0x3c0] sm:$0xff]
    %v852 = vld [vmem:[#allocation2 + $0x3c8] sm:$0xff]
    %v853 = vld [vmem:[#allocation2 + $0x3d0] sm:$0xff]
    %v854 = vld [vmem:[#allocation2 + $0x3d8] sm:$0xff]
    %v855 = vld [vmem:[#allocation2 + $0x3e0] sm:$0xff]
    %v856 = vld [vmem:[#allocation2 + $0x3e8] sm:$0xff]
    %v857 = vld [vmem:[#allocation2 + $0x3f0] sm:$0xff]
    %v858 = vld [vmem:[#allocation2 + $0x3f8] sm:$0xff]
    %v859 = vld [vmem:[#allocation4 + $0x10] sm:$0x1]
    %v860 = vlaneseq
    %v861 = vshrl.u32 %v860, 7
    %v862 = vsub.s32 0, %v861
    %v863 = vrot.slane %v859, %v862
    %864 = vmatprep.subr.mxu0 0.0
    %865 = vmatpush1.msra.mxu0 %v843
    %866 = vmatprep.subr.mxu0 0.0
    %867 = vmatpush1.msra.mxu0 %v844
    %868 = vmatprep.subr.mxu0 0.0
    %869 = vmatpush1.msra.mxu0 %v845
    %870 = vmatprep.subr.mxu0 0.0
    %871 = vmatpush1.msra.mxu0 %v846
    %872 = vmatprep.subr.mxu0 0.0
    %873 = vmatpush1.msra.mxu0 %v847
    %874 = vmatprep.subr.mxu0 0.0
    %875 = vmatpush1.msra.mxu0 %v848
    %876 = vmatprep.subr.mxu0 0.0
    %877 = vmatpush1.msra.mxu0 %v849
    %878 = vmatprep.subr.mxu0 0.0
    %879 = vmatpush1.msra.mxu0 %v850
    %880 = vmatprep.subr.mxu0 0.0
    %881 = vmatpush1.msra.mxu0 %v851
    %882 = vmatprep.subr.mxu0 0.0
    %883 = vmatpush1.msra.mxu0 %v852
    %884 = vmatprep.subr.mxu0 0.0
    %885 = vmatpush1.msra.mxu0 %v853
    %886 = vmatprep.subr.mxu0 0.0
    %887 = vmatpush1.msra.mxu0 %v854
    %888 = vmatprep.subr.mxu0 0.0
    %889 = vmatpush1.msra.mxu0 %v855
    %890 = vmatprep.subr.mxu0 0.0
    %891 = vmatpush1.msra.mxu0 %v856
    %892 = vmatprep.subr.mxu0 0.0
    %893 = vmatpush1.msra.mxu0 %v857
    %894 = vmatprep.subr.mxu0 0.0
    %895 = vmatpush1.msra.mxu0 %v858
    %896 = vmatprep.subr.mxu0 0.0
    %897 = vmatpush1.msra.mxu0 0.0
    %898 = vmatprep.subr.mxu0 0.0
    %899 = vmatpush1.msra.mxu0 0.0
    %900 = vmatprep.subr.mxu0 0.0
    %901 = vmatpush1.msra.mxu0 0.0
    %902 = vmatprep.subr.mxu0 0.0
    %903 = vmatpush1.msra.mxu0 0.0
    %904 = vmatprep.subr.mxu0 0.0
    %905 = vmatpush1.msra.mxu0 0.0
    %906 = vmatprep.subr.mxu0 0.0
    %907 = vmatpush1.msra.mxu0 0.0
    %908 = vmatprep.subr.mxu0 0.0
    %909 = vmatpush1.msra.mxu0 0.0
    %910 = vmatprep.subr.mxu0 0.0
    %911 = vmatpush1.msra.mxu0 0.0
    %912 = vmatprep.subr.mxu0 0.0
    %913 = vmatpush1.msra.mxu0 0.0
    %914 = vmatprep.subr.mxu0 0.0
    %915 = vmatpush1.msra.mxu0 0.0
    %916 = vmatprep.subr.mxu0 0.0
    %917 = vmatpush1.msra.mxu0 0.0
    %918 = vmatprep.subr.mxu0 0.0
    %919 = vmatpush1.msra.mxu0 0.0
    %920 = vmatprep.subr.mxu0 0.0
    %921 = vmatpush1.msra.mxu0 0.0
    %922 = vmatprep.subr.mxu0 0.0
    %923 = vmatpush1.msra.mxu0 0.0
    %924 = vmatprep.subr.mxu0 0.0
    %925 = vmatpush1.msra.mxu0 0.0
    %926 = vmatprep.subr.mxu0 0.0
    %927 = vmatpush1.msra.mxu0 0.0
    %928 = vmatprep.mubr.f32.mxu0 0.0
    %929 = vmatmul.mubr.f32.gmra.mrb[0].mxu0 %v819
    %v930 = vpop.f32.mrb[0].mxu0
    %v931 = vadd.f32 %v863, %v930
    %v932 = vpop.f32.mrb[0].mxu0
    %933 = vdwg.mxu0
    %v934 = vmax.f32 %v931, 0.0
    %v935 = vmul.f32 %v934, %v934
    %936 = vadd.xlane.f32.xlu0 %v935
    %v937 = vpop.xlane.xlu0 %936
    %v938 = vmul.f32 %v937, 0.0078125
    %v939 = vmul.f32 %v935, %v935
    %940 = vadd.xlane.f32.xlu0 %v939
    %v941 = vpop.xlane.xlu0 %940
    %v942 = vmul.f32 %v941, 0.0078125
    %v943 = vmul.f32 %v938, %v938
    %v944 = vsub.f32 %v942, %v943
    %v945 = vsub.f32 %v935, %v938
    %v946 = vadd.f32 %v944, 1e-05
    %v947 = vrsqrt.pop %v946
    %v948 = vmul.f32 %v945, %v947
    %v949 = vld [vmem:[#allocation4 + $0x11] sm:$0x1]
    %v950 = vlaneseq
    %v951 = vshrl.u32 %v950, 7
    %v952 = vsub.s32 0, %v951
    %v953 = vrot.slane %v949, %v952
    %v954 = vmul.f32 %v948, %v953
    %v955 = vld [vmem:[#allocation2 + $0x400] sm:$0xff]
    %v956 = vld [vmem:[#allocation2 + $0x408] sm:$0xff]
    %v957 = vld [vmem:[#allocation2 + $0x410] sm:$0xff]
    %v958 = vld [vmem:[#allocation2 + $0x418] sm:$0xff]
    %v959 = vld [vmem:[#allocation2 + $0x420] sm:$0xff]
    %v960 = vld [vmem:[#allocation2 + $0x428] sm:$0xff]
    %v961 = vld [vmem:[#allocation2 + $0x430] sm:$0xff]
    %v962 = vld [vmem:[#allocation2 + $0x438] sm:$0xff]
    %v963 = vld [vmem:[#allocation2 + $0x440] sm:$0xff]
    %v964 = vld [vmem:[#allocation2 + $0x448] sm:$0xff]
    %v965 = vld [vmem:[#allocation2 + $0x450] sm:$0xff]
    %v966 = vld [vmem:[#allocation2 + $0x458] sm:$0xff]
    %v967 = vld [vmem:[#allocation2 + $0x460] sm:$0xff]
    %v968 = vld [vmem:[#allocation2 + $0x468] sm:$0xff]
    %v969 = vld [vmem:[#allocation2 + $0x470] sm:$0xff]
    %v970 = vld [vmem:[#allocation2 + $0x478] sm:$0xff]
    %v971 = vld [vmem:[#allocation4 + $0x12] sm:$0x1]
    %v972 = vlaneseq
    %v973 = vshrl.u32 %v972, 7
    %v974 = vsub.s32 0, %v973
    %v975 = vrot.slane %v971, %v974
    %976 = vmatprep.subr.mxu0 0.0
    %977 = vmatpush1.msra.mxu0 %v955
    %978 = vmatprep.subr.mxu0 0.0
    %979 = vmatpush1.msra.mxu0 %v956
    %980 = vmatprep.subr.mxu0 0.0
    %981 = vmatpush1.msra.mxu0 %v957
    %982 = vmatprep.subr.mxu0 0.0
    %983 = vmatpush1.msra.mxu0 %v958
    %984 = vmatprep.subr.mxu0 0.0
    %985 = vmatpush1.msra.mxu0 %v959
    %986 = vmatprep.subr.mxu0 0.0
    %987 = vmatpush1.msra.mxu0 %v960
    %988 = vmatprep.subr.mxu0 0.0
    %989 = vmatpush1.msra.mxu0 %v961
    %990 = vmatprep.subr.mxu0 0.0
    %991 = vmatpush1.msra.mxu0 %v962
    %992 = vmatprep.subr.mxu0 0.0
    %993 = vmatpush1.msra.mxu0 %v963
    %994 = vmatprep.subr.mxu0 0.0
    %995 = vmatpush1.msra.mxu0 %v964
    %996 = vmatprep.subr.mxu0 0.0
    %997 = vmatpush1.msra.mxu0 %v965
    %998 = vmatprep.subr.mxu0 0.0
    %999 = vmatpush1.msra.mxu0 %v966
    %1000 = vmatprep.subr.mxu0 0.0
    %1001 = vmatpush1.msra.mxu0 %v967
    %1002 = vmatprep.subr.mxu0 0.0
    %1003 = vmatpush1.msra.mxu0 %v968
    %1004 = vmatprep.subr.mxu0 0.0
    %1005 = vmatpush1.msra.mxu0 %v969
    %1006 = vmatprep.subr.mxu0 0.0
    %1007 = vmatpush1.msra.mxu0 %v970
    %1008 = vmatprep.subr.mxu0 0.0
    %1009 = vmatpush1.msra.mxu0 0.0
    %1010 = vmatprep.subr.mxu0 0.0
    %1011 = vmatpush1.msra.mxu0 0.0
    %1012 = vmatprep.subr.mxu0 0.0
    %1013 = vmatpush1.msra.mxu0 0.0
    %1014 = vmatprep.subr.mxu0 0.0
    %1015 = vmatpush1.msra.mxu0 0.0
    %1016 = vmatprep.subr.mxu0 0.0
    %1017 = vmatpush1.msra.mxu0 0.0
    %1018 = vmatprep.subr.mxu0 0.0
    %1019 = vmatpush1.msra.mxu0 0.0
    %1020 = vmatprep.subr.mxu0 0.0
    %1021 = vmatpush1.msra.mxu0 0.0
    %1022 = vmatprep.subr.mxu0 0.0
    %1023 = vmatpush1.msra.mxu0 0.0
    %1024 = vmatprep.subr.mxu0 0.0
    %1025 = vmatpush1.msra.mxu0 0.0
    %1026 = vmatprep.subr.mxu0 0.0
    %1027 = vmatpush1.msra.mxu0 0.0
    %1028 = vmatprep.subr.mxu0 0.0
    %1029 = vmatpush1.msra.mxu0 0.0
    %1030 = vmatprep.subr.mxu0 0.0
    %1031 = vmatpush1.msra.mxu0 0.0
    %1032 = vmatprep.subr.mxu0 0.0
    %1033 = vmatpush1.msra.mxu0 0.0
    %1034 = vmatprep.subr.mxu0 0.0
    %1035 = vmatpush1.msra.mxu0 0.0
    %1036 = vmatprep.subr.mxu0 0.0
    %1037 = vmatpush1.msra.mxu0 0.0
    %1038 = vmatprep.subr.mxu0 0.0
    %1039 = vmatpush1.msra.mxu0 0.0
    %1040 = vmatprep.mubr.f32.mxu0 0.0
    %1041 = vmatmul.mubr.f32.gmra.mrb[0].mxu0 %v954
    %v1042 = vpop.f32.mrb[0].mxu0
    %v1043 = vadd.f32 %v975, %v1042
    %v1044 = vpop.f32.mrb[0].mxu0
    %1045 = vdwg.mxu0
    %1046 = vadd.xlane.f32.xlu0 %v1043
    %v1047 = vpop.xlane.xlu0 %1046
    %v1048 = vmul.f32 %v1047, 0.015625
    %v1049 = vmul.f32 %v1043, %v1043
    %1050 = vadd.xlane.f32.xlu0 %v1049
    %v1051 = vpop.xlane.xlu0 %1050
    %v1052 = vmul.f32 %v1051, 0.015625
    %v1053 = vmul.f32 %v1048, %v1048
    %v1054 = vsub.f32 %v1052, %v1053
    %v1055 = vsub.f32 %v1043, %v1048
    %v1056 = vadd.f32 %v1054, 1e-05
    %v1057 = vrsqrt.pop %v1056
    %v1058 = vmul.f32 %v1055, %v1057
    %v1059 = vld [vmem:[#allocation4 + $0x13] sm:$0x1]
    %v1060 = vlaneseq
    %v1061 = vshrl.u32 %v1060, 7
    %v1062 = vsub.s32 0, %v1061
    %v1063 = vrot.slane %v1059, %v1062
    %v1064 = vmul.f32 %v1058, %v1063
    %v1065 = vld [vmem:[#allocation4 + $0x14] sm:$0x1]
    %v1066 = vlaneseq
    %v1067 = vshrl.u32 %v1066, 7
    %v1068 = vsub.s32 0, %v1067
    %v1069 = vrot.slane %v1065, %v1068
    %v1070 = vmul.f32 %v819, %v1069
    %v1071 = vadd.f32 %v1070, %v1064
    %v1072 = vld [vmem:[#allocation2 + $0x480] sm:$0xff]
    %v1073 = vld [vmem:[#allocation2 + $0x488] sm:$0xff]
    %v1074 = vld [vmem:[#allocation2 + $0x490] sm:$0xff]
    %v1075 = vld [vmem:[#allocation2 + $0x498] sm:$0xff]
    %v1076 = vld [vmem:[#allocation2 + $0x4a0] sm:$0xff]
    %v1077 = vld [vmem:[#allocation2 + $0x4a8] sm:$0xff]
    %v1078 = vld [vmem:[#allocation2 + $0x4b0] sm:$0xff]
    %v1079 = vld [vmem:[#allocation2 + $0x4b8] sm:$0xff]
    %v1080 = vld [vmem:[#allocation2 + $0x4c0] sm:$0xff]
    %v1081 = vld [vmem:[#allocation2 + $0x4c8] sm:$0xff]
    %v1082 = vld [vmem:[#allocation2 + $0x4d0] sm:$0xff]
    %v1083 = vld [vmem:[#allocation2 + $0x4d8] sm:$0xff]
    %v1084 = vld [vmem:[#allocation2 + $0x4e0] sm:$0xff]
    %v1085 = vld [vmem:[#allocation2 + $0x4e8] sm:$0xff]
    %v1086 = vld [vmem:[#allocation2 + $0x4f0] sm:$0xff]
    %v1087 = vld [vmem:[#allocation2 + $0x4f8] sm:$0xff]
    %v1088 = vld [vmem:[#allocation4 + $0x15] sm:$0x1]
    %v1089 = vlaneseq
    %v1090 = vshrl.u32 %v1089, 7
    %v1091 = vsub.s32 0, %v1090
    %v1092 = vrot.slane %v1088, %v1091
    %1093 = vmatprep.subr.mxu0 0.0
    %1094 = vmatpush1.msra.mxu0 %v1072
    %1095 = vmatprep.subr.mxu0 0.0
    %1096 = vmatpush1.msra.mxu0 %v1073
    %1097 = vmatprep.subr.mxu0 0.0
    %1098 = vmatpush1.msra.mxu0 %v1074
    %1099 = vmatprep.subr.mxu0 0.0
    %1100 = vmatpush1.msra.mxu0 %v1075
    %1101 = vmatprep.subr.mxu0 0.0
    %1102 = vmatpush1.msra.mxu0 %v1076
    %1103 = vmatprep.subr.mxu0 0.0
    %1104 = vmatpush1.msra.mxu0 %v1077
    %1105 = vmatprep.subr.mxu0 0.0
    %1106 = vmatpush1.msra.mxu0 %v1078
    %1107 = vmatprep.subr.mxu0 0.0
    %1108 = vmatpush1.msra.mxu0 %v1079
    %1109 = vmatprep.subr.mxu0 0.0
    %1110 = vmatpush1.msra.mxu0 %v1080
    %1111 = vmatprep.subr.mxu0 0.0
    %1112 = vmatpush1.msra.mxu0 %v1081
    %1113 = vmatprep.subr.mxu0 0.0
    %1114 = vmatpush1.msra.mxu0 %v1082
    %1115 = vmatprep.subr.mxu0 0.0
    %1116 = vmatpush1.msra.mxu0 %v1083
    %1117 = vmatprep.subr.mxu0 0.0
    %1118 = vmatpush1.msra.mxu0 %v1084
    %1119 = vmatprep.subr.mxu0 0.0
    %1120 = vmatpush1.msra.mxu0 %v1085
    %1121 = vmatprep.subr.mxu0 0.0
    %1122 = vmatpush1.msra.mxu0 %v1086
    %1123 = vmatprep.subr.mxu0 0.0
    %1124 = vmatpush1.msra.mxu0 %v1087
    %1125 = vmatprep.subr.mxu0 0.0
    %1126 = vmatpush1.msra.mxu0 0.0
    %1127 = vmatprep.subr.mxu0 0.0
    %1128 = vmatpush1.msra.mxu0 0.0
    %1129 = vmatprep.subr.mxu0 0.0
    %1130 = vmatpush1.msra.mxu0 0.0
    %1131 = vmatprep.subr.mxu0 0.0
    %1132 = vmatpush1.msra.mxu0 0.0
    %1133 = vmatprep.subr.mxu0 0.0
    %1134 = vmatpush1.msra.mxu0 0.0
    %1135 = vmatprep.subr.mxu0 0.0
    %1136 = vmatpush1.msra.mxu0 0.0
    %1137 = vmatprep.subr.mxu0 0.0
    %1138 = vmatpush1.msra.mxu0 0.0
    %1139 = vmatprep.subr.mxu0 0.0
    %1140 = vmatpush1.msra.mxu0 0.0
    %1141 = vmatprep.subr.mxu0 0.0
    %1142 = vmatpush1.msra.mxu0 0.0
    %1143 = vmatprep.subr.mxu0 0.0
    %1144 = vmatpush1.msra.mxu0 0.0
    %1145 = vmatprep.subr.mxu0 0.0
    %1146 = vmatpush1.msra.mxu0 0.0
    %1147 = vmatprep.subr.mxu0 0.0
    %1148 = vmatpush1.msra.mxu0 0.0
    %1149 = vmatprep.subr.mxu0 0.0
    %1150 = vmatpush1.msra.mxu0 0.0
    %1151 = vmatprep.subr.mxu0 0.0
    %1152 = vmatpush1.msra.mxu0 0.0
    %1153 = vmatprep.subr.mxu0 0.0
    %1154 = vmatpush1.msra.mxu0 0.0
    %1155 = vmatprep.subr.mxu0 0.0
    %1156 = vmatpush1.msra.mxu0 0.0
    %1157 = vmatprep.mubr.f32.mxu0 0.0
    %1158 = vmatmul.mubr.f32.gmra.mrb[0].mxu0 %v1071
    %v1159 = vpop.f32.mrb[0].mxu0
    %v1160 = vadd.f32 %v1092, %v1159
    %v1161 = vpop.f32.mrb[0].mxu0
    %1162 = vdwg.mxu0
    %v1163 = vld [vmem:[#allocation2 + $0x500] sm:$0xff]
    %v1164 = vld [vmem:[#allocation2 + $0x508] sm:$0xff]
    %v1165 = vld [vmem:[#allocation2 + $0x510] sm:$0xff]
    %v1166 = vld [vmem:[#allocation2 + $0x518] sm:$0xff]
    %v1167 = vld [vmem:[#allocation2 + $0x520] sm:$0xff]
    %v1168 = vld [vmem:[#allocation2 + $0x528] sm:$0xff]
    %v1169 = vld [vmem:[#allocation2 + $0x530] sm:$0xff]
    %v1170 = vld [vmem:[#allocation2 + $0x538] sm:$0xff]
    %v1171 = vld [vmem:[#allocation2 + $0x540] sm:$0xff]
    %v1172 = vld [vmem:[#allocation2 + $0x548] sm:$0xff]
    %v1173 = vld [vmem:[#allocation2 + $0x550] sm:$0xff]
    %v1174 = vld [vmem:[#allocation2 + $0x558] sm:$0xff]
    %v1175 = vld [vmem:[#allocation2 + $0x560] sm:$0xff]
    %v1176 = vld [vmem:[#allocation2 + $0x568] sm:$0xff]
    %v1177 = vld [vmem:[#allocation2 + $0x570] sm:$0xff]
    %v1178 = vld [vmem:[#allocation2 + $0x578] sm:$0xff]
    %v1179 = vld [vmem:[#allocation4 + $0x16] sm:$0x1]
    %v1180 = vlaneseq
    %v1181 = vshrl.u32 %v1180, 7
    %v1182 = vsub.s32 0, %v1181
    %v1183 = vrot.slane %v1179, %v1182
    %1184 = vmatprep.subr.mxu0 0.0
    %1185 = vmatpush1.msra.mxu0 %v1163
    %1186 = vmatprep.subr.mxu0 0.0
    %1187 = vmatpush1.msra.mxu0 %v1164
    %1188 = vmatprep.subr.mxu0 0.0
    %1189 = vmatpush1.msra.mxu0 %v1165
    %1190 = vmatprep.subr.mxu0 0.0
    %1191 = vmatpush1.msra.mxu0 %v1166
    %1192 = vmatprep.subr.mxu0 0.0
    %1193 = vmatpush1.msra.mxu0 %v1167
    %1194 = vmatprep.subr.mxu0 0.0
    %1195 = vmatpush1.msra.mxu0 %v1168
    %1196 = vmatprep.subr.mxu0 0.0
    %1197 = vmatpush1.msra.mxu0 %v1169
    %1198 = vmatprep.subr.mxu0 0.0
    %1199 = vmatpush1.msra.mxu0 %v1170
    %1200 = vmatprep.subr.mxu0 0.0
    %1201 = vmatpush1.msra.mxu0 %v1171
    %1202 = vmatprep.subr.mxu0 0.0
    %1203 = vmatpush1.msra.mxu0 %v1172
    %1204 = vmatprep.subr.mxu0 0.0
    %1205 = vmatpush1.msra.mxu0 %v1173
    %1206 = vmatprep.subr.mxu0 0.0
    %1207 = vmatpush1.msra.mxu0 %v1174
    %1208 = vmatprep.subr.mxu0 0.0
    %1209 = vmatpush1.msra.mxu0 %v1175
    %1210 = vmatprep.subr.mxu0 0.0
    %1211 = vmatpush1.msra.mxu0 %v1176
    %1212 = vmatprep.subr.mxu0 0.0
    %1213 = vmatpush1.msra.mxu0 %v1177
    %1214 = vmatprep.subr.mxu0 0.0
    %1215 = vmatpush1.msra.mxu0 %v1178
    %1216 = vmatprep.subr.mxu0 0.0
    %1217 = vmatpush1.msra.mxu0 0.0
    %1218 = vmatprep.subr.mxu0 0.0
    %1219 = vmatpush1.msra.mxu0 0.0
    %1220 = vmatprep.subr.mxu0 0.0
    %1221 = vmatpush1.msra.mxu0 0.0
    %1222 = vmatprep.subr.mxu0 0.0
    %1223 = vmatpush1.msra.mxu0 0.0
    %1224 = vmatprep.subr.mxu0 0.0
    %1225 = vmatpush1.msra.mxu0 0.0
    %1226 = vmatprep.subr.mxu0 0.0
    %1227 = vmatpush1.msra.mxu0 0.0
    %1228 = vmatprep.subr.mxu0 0.0
    %1229 = vmatpush1.msra.mxu0 0.0
    %1230 = vmatprep.subr.mxu0 0.0
    %1231 = vmatpush1.msra.mxu0 0.0
    %1232 = vmatprep.subr.mxu0 0.0
    %1233 = vmatpush1.msra.mxu0 0.0
    %1234 = vmatprep.subr.mxu0 0.0
    %1235 = vmatpush1.msra.mxu0 0.0
    %1236 = vmatprep.subr.mxu0 0.0
    %1237 = vmatpush1.msra.mxu0 0.0
    %1238 = vmatprep.subr.mxu0 0.0
    %1239 = vmatpush1.msra.mxu0 0.0
    %1240 = vmatprep.subr.mxu0 0.0
    %1241 = vmatpush1.msra.mxu0 0.0
    %1242 = vmatprep.subr.mxu0 0.0
    %1243 = vmatpush1.msra.mxu0 0.0
    %1244 = vmatprep.subr.mxu0 0.0
    %1245 = vmatpush1.msra.mxu0 0.0
    %1246 = vmatprep.subr.mxu0 0.0
    %1247 = vmatpush1.msra.mxu0 0.0
    %1248 = vmatprep.mubr.f32.mxu0 0.0
    %1249 = vmatmul.mubr.f32.gmra.mrb[0].mxu0 %v842
    %v1250 = vpop.f32.mrb[0].mxu0
    %v1251 = vadd.f32 %v1183, %v1250
    %v1252 = vpop.f32.mrb[0].mxu0
    %1253 = vdwg.mxu0
    %v1254 = vmax.f32 %v1251, 0.0
    %v1255 = vmul.f32 %v1254, %v1254
    %1256 = vadd.xlane.f32.xlu0 %v1255
    %v1257 = vpop.xlane.xlu0 %1256
    %v1258 = vmul.f32 %v1257, 0.0078125
    %v1259 = vmul.f32 %v1255, %v1255
    %1260 = vadd.xlane.f32.xlu0 %v1259
    %v1261 = vpop.xlane.xlu0 %1260
    %v1262 = vmul.f32 %v1261, 0.0078125
    %v1263 = vmul.f32 %v1258, %v1258
    %v1264 = vsub.f32 %v1262, %v1263
    %v1265 = vsub.f32 %v1255, %v1258
    %v1266 = vadd.f32 %v1264, 1e-05
    %v1267 = vrsqrt.pop %v1266
    %v1268 = vmul.f32 %v1265, %v1267
    %v1269 = vld [vmem:[#allocation4 + $0x17] sm:$0x1]
    %v1270 = vlaneseq
    %v1271 = vshrl.u32 %v1270, 7
    %v1272 = vsub.s32 0, %v1271
    %v1273 = vrot.slane %v1269, %v1272
    %v1274 = vmul.f32 %v1268, %v1273
    %v1275 = vld [vmem:[#allocation2 + $0x580] sm:$0xff]
    %v1276 = vld [vmem:[#allocation2 + $0x588] sm:$0xff]
    %v1277 = vld [vmem:[#allocation2 + $0x590] sm:$0xff]
    %v1278 = vld [vmem:[#allocation2 + $0x598] sm:$0xff]
    %v1279 = vld [vmem:[#allocation2 + $0x5a0] sm:$0xff]
    %v1280 = vld [vmem:[#allocation2 + $0x5a8] sm:$0xff]
    %v1281 = vld [vmem:[#allocation2 + $0x5b0] sm:$0xff]
    %v1282 = vld [vmem:[#allocation2 + $0x5b8] sm:$0xff]
    %v1283 = vld [vmem:[#allocation2 + $0x5c0] sm:$0xff]
    %v1284 = vld [vmem:[#allocation2 + $0x5c8] sm:$0xff]
    %v1285 = vld [vmem:[#allocation2 + $0x5d0] sm:$0xff]
    %v1286 = vld [vmem:[#allocation2 + $0x5d8] sm:$0xff]
    %v1287 = vld [vmem:[#allocation2 + $0x5e0] sm:$0xff]
    %v1288 = vld [vmem:[#allocation2 + $0x5e8] sm:$0xff]
    %v1289 = vld [vmem:[#allocation2 + $0x5f0] sm:$0xff]
    %v1290 = vld [vmem:[#allocation2 + $0x5f8] sm:$0xff]
    %v1291 = vld [vmem:[#allocation4 + $0x18] sm:$0x1]
    %v1292 = vlaneseq
    %v1293 = vshrl.u32 %v1292, 7
    %v1294 = vsub.s32 0, %v1293
    %v1295 = vrot.slane %v1291, %v1294
    %1296 = vmatprep.subr.mxu0 0.0
    %1297 = vmatpush1.msra.mxu0 %v1275
    %1298 = vmatprep.subr.mxu0 0.0
    %1299 = vmatpush1.msra.mxu0 %v1276
    %1300 = vmatprep.subr.mxu0 0.0
    %1301 = vmatpush1.msra.mxu0 %v1277
    %1302 = vmatprep.subr.mxu0 0.0
    %1303 = vmatpush1.msra.mxu0 %v1278
    %1304 = vmatprep.subr.mxu0 0.0
    %1305 = vmatpush1.msra.mxu0 %v1279
    %1306 = vmatprep.subr.mxu0 0.0
    %1307 = vmatpush1.msra.mxu0 %v1280
    %1308 = vmatprep.subr.mxu0 0.0
    %1309 = vmatpush1.msra.mxu0 %v1281
    %1310 = vmatprep.subr.mxu0 0.0
    %1311 = vmatpush1.msra.mxu0 %v1282
    %1312 = vmatprep.subr.mxu0 0.0
    %1313 = vmatpush1.msra.mxu0 %v1283
    %1314 = vmatprep.subr.mxu0 0.0
    %1315 = vmatpush1.msra.mxu0 %v1284
    %1316 = vmatprep.subr.mxu0 0.0
    %1317 = vmatpush1.msra.mxu0 %v1285
    %1318 = vmatprep.subr.mxu0 0.0
    %1319 = vmatpush1.msra.mxu0 %v1286
    %1320 = vmatprep.subr.mxu0 0.0
    %1321 = vmatpush1.msra.mxu0 %v1287
    %1322 = vmatprep.subr.mxu0 0.0
    %1323 = vmatpush1.msra.mxu0 %v1288
    %1324 = vmatprep.subr.mxu0 0.0
    %1325 = vmatpush1.msra.mxu0 %v1289
    %1326 = vmatprep.subr.mxu0 0.0
    %1327 = vmatpush1.msra.mxu0 %v1290
    %1328 = vmatprep.subr.mxu0 0.0
    %1329 = vmatpush1.msra.mxu0 0.0
    %1330 = vmatprep.subr.mxu0 0.0
    %1331 = vmatpush1.msra.mxu0 0.0
    %1332 = vmatprep.subr.mxu0 0.0
    %1333 = vmatpush1.msra.mxu0 0.0
    %1334 = vmatprep.subr.mxu0 0.0
    %1335 = vmatpush1.msra.mxu0 0.0
    %1336 = vmatprep.subr.mxu0 0.0
    %1337 = vmatpush1.msra.mxu0 0.0
    %1338 = vmatprep.subr.mxu0 0.0
    %1339 = vmatpush1.msra.mxu0 0.0
    %1340 = vmatprep.subr.mxu0 0.0
    %1341 = vmatpush1.msra.mxu0 0.0
    %1342 = vmatprep.subr.mxu0 0.0
    %1343 = vmatpush1.msra.mxu0 0.0
    %1344 = vmatprep.subr.mxu0 0.0
    %1345 = vmatpush1.msra.mxu0 0.0
    %1346 = vmatprep.subr.mxu0 0.0
    %1347 = vmatpush1.msra.mxu0 0.0
    %1348 = vmatprep.subr.mxu0 0.0
    %1349 = vmatpush1.msra.mxu0 0.0
    %1350 = vmatprep.subr.mxu0 0.0
    %1351 = vmatpush1.msra.mxu0 0.0
    %1352 = vmatprep.subr.mxu0 0.0
    %1353 = vmatpush1.msra.mxu0 0.0
    %1354 = vmatprep.subr.mxu0 0.0
    %1355 = vmatpush1.msra.mxu0 0.0
    %1356 = vmatprep.subr.mxu0 0.0
    %1357 = vmatpush1.msra.mxu0 0.0
    %1358 = vmatprep.subr.mxu0 0.0
    %1359 = vmatpush1.msra.mxu0 0.0
    %1360 = vmatprep.mubr.f32.mxu0 0.0
    %1361 = vmatmul.mubr.f32.gmra.mrb[0].mxu0 %v1274
    %v1362 = vpop.f32.mrb[0].mxu0
    %v1363 = vadd.f32 %v1295, %v1362
    %v1364 = vpop.f32.mrb[0].mxu0
    %1365 = vdwg.mxu0
    %1366 = vadd.xlane.f32.xlu0 %v1363
    %v1367 = vpop.xlane.xlu0 %1366
    %v1368 = vmul.f32 %v1367, 0.015625
    %v1369 = vmul.f32 %v1363, %v1363
    %1370 = vadd.xlane.f32.xlu0 %v1369
    %v1371 = vpop.xlane.xlu0 %1370
    %v1372 = vmul.f32 %v1371, 0.015625
    %v1373 = vmul.f32 %v1368, %v1368
    %v1374 = vsub.f32 %v1372, %v1373
    %v1375 = vsub.f32 %v1363, %v1368
    %v1376 = vadd.f32 %v1374, 1e-05
    %v1377 = vrsqrt.pop %v1376
    %v1378 = vmul.f32 %v1375, %v1377
    %v1379 = vld [vmem:[#allocation4 + $0x19] sm:$0x1]
    %v1380 = vlaneseq
    %v1381 = vshrl.u32 %v1380, 7
    %v1382 = vsub.s32 0, %v1381
    %v1383 = vrot.slane %v1379, %v1382
    %v1384 = vmul.f32 %v1378, %v1383
    %v1385 = vld [vmem:[#allocation4 + $0x1a] sm:$0x1]
    %v1386 = vlaneseq
    %v1387 = vshrl.u32 %v1386, 7
    %v1388 = vsub.s32 0, %v1387
    %v1389 = vrot.slane %v1385, %v1388
    %v1390 = vmul.f32 %v842, %v1389
    %v1391 = vadd.f32 %v1390, %v1384
    %v1392 = vld [vmem:[#allocation2 + $0x600] sm:$0xff]
    %v1393 = vld [vmem:[#allocation2 + $0x608] sm:$0xff]
    %v1394 = vld [vmem:[#allocation2 + $0x610] sm:$0xff]
    %v1395 = vld [vmem:[#allocation2 + $0x618] sm:$0xff]
    %v1396 = vld [vmem:[#allocation2 + $0x620] sm:$0xff]
    %v1397 = vld [vmem:[#allocation2 + $0x628] sm:$0xff]
    %v1398 = vld [vmem:[#allocation2 + $0x630] sm:$0xff]
    %v1399 = vld [vmem:[#allocation2 + $0x638] sm:$0xff]
    %v1400 = vld [vmem:[#allocation2 + $0x640] sm:$0xff]
    %v1401 = vld [vmem:[#allocation2 + $0x648] sm:$0xff]
    %v1402 = vld [vmem:[#allocation2 + $0x650] sm:$0xff]
    %v1403 = vld [vmem:[#allocation2 + $0x658] sm:$0xff]
    %v1404 = vld [vmem:[#allocation2 + $0x660] sm:$0xff]
    %v1405 = vld [vmem:[#allocation2 + $0x668] sm:$0xff]
    %v1406 = vld [vmem:[#allocation2 + $0x670] sm:$0xff]
    %v1407 = vld [vmem:[#allocation2 + $0x678] sm:$0xff]
    %v1408 = vld [vmem:[#allocation4 + $0x1b] sm:$0x1]
    %v1409 = vlaneseq
    %v1410 = vshrl.u32 %v1409, 7
    %v1411 = vsub.s32 0, %v1410
    %v1412 = vrot.slane %v1408, %v1411
    %1413 = vmatprep.subr.mxu0 0.0
    %1414 = vmatpush1.msra.mxu0 %v1392
    %1415 = vmatprep.subr.mxu0 0.0
    %1416 = vmatpush1.msra.mxu0 %v1393
    %1417 = vmatprep.subr.mxu0 0.0
    %1418 = vmatpush1.msra.mxu0 %v1394
    %1419 = vmatprep.subr.mxu0 0.0
    %1420 = vmatpush1.msra.mxu0 %v1395
    %1421 = vmatprep.subr.mxu0 0.0
    %1422 = vmatpush1.msra.mxu0 %v1396
    %1423 = vmatprep.subr.mxu0 0.0
    %1424 = vmatpush1.msra.mxu0 %v1397
    %1425 = vmatprep.subr.mxu0 0.0
    %1426 = vmatpush1.msra.mxu0 %v1398
    %1427 = vmatprep.subr.mxu0 0.0
    %1428 = vmatpush1.msra.mxu0 %v1399
    %1429 = vmatprep.subr.mxu0 0.0
    %1430 = vmatpush1.msra.mxu0 %v1400
    %1431 = vmatprep.subr.mxu0 0.0
    %1432 = vmatpush1.msra.mxu0 %v1401
    %1433 = vmatprep.subr.mxu0 0.0
    %1434 = vmatpush1.msra.mxu0 %v1402
    %1435 = vmatprep.subr.mxu0 0.0
    %1436 = vmatpush1.msra.mxu0 %v1403
    %1437 = vmatprep.subr.mxu0 0.0
    %1438 = vmatpush1.msra.mxu0 %v1404
    %1439 = vmatprep.subr.mxu0 0.0
    %1440 = vmatpush1.msra.mxu0 %v1405
    %1441 = vmatprep.subr.mxu0 0.0
    %1442 = vmatpush1.msra.mxu0 %v1406
    %1443 = vmatprep.subr.mxu0 0.0
    %1444 = vmatpush1.msra.mxu0 %v1407
    %1445 = vmatprep.subr.mxu0 0.0
    %1446 = vmatpush1.msra.mxu0 0.0
    %1447 = vmatprep.subr.mxu0 0.0
    %1448 = vmatpush1.msra.mxu0 0.0
    %1449 = vmatprep.subr.mxu0 0.0
    %1450 = vmatpush1.msra.mxu0 0.0
    %1451 = vmatprep.subr.mxu0 0.0
    %1452 = vmatpush1.msra.mxu0 0.0
    %1453 = vmatprep.subr.mxu0 0.0
    %1454 = vmatpush1.msra.mxu0 0.0
    %1455 = vmatprep.subr.mxu0 0.0
    %1456 = vmatpush1.msra.mxu0 0.0
    %1457 = vmatprep.subr.mxu0 0.0
    %1458 = vmatpush1.msra.mxu0 0.0
    %1459 = vmatprep.subr.mxu0 0.0
    %1460 = vmatpush1.msra.mxu0 0.0
    %1461 = vmatprep.subr.mxu0 0.0
    %1462 = vmatpush1.msra.mxu0 0.0
    %1463 = vmatprep.subr.mxu0 0.0
    %1464 = vmatpush1.msra.mxu0 0.0
    %1465 = vmatprep.subr.mxu0 0.0
    %1466 = vmatpush1.msra.mxu0 0.0
    %1467 = vmatprep.subr.mxu0 0.0
    %1468 = vmatpush1.msra.mxu0 0.0
    %1469 = vmatprep.subr.mxu0 0.0
    %1470 = vmatpush1.msra.mxu0 0.0
    %1471 = vmatprep.subr.mxu0 0.0
    %1472 = vmatpush1.msra.mxu0 0.0
    %1473 = vmatprep.subr.mxu0 0.0
    %1474 = vmatpush1.msra.mxu0 0.0
    %1475 = vmatprep.subr.mxu0 0.0
    %1476 = vmatpush1.msra.mxu0 0.0
    %1477 = vmatprep.mubr.f32.mxu0 0.0
    %1478 = vmatmul.mubr.f32.gmra.mrb[0].mxu0 %v1391
    %v1479 = vpop.f32.mrb[0].mxu0
    %v1480 = vadd.f32 %v1412, %v1479
    %v1481 = vpop.f32.mrb[0].mxu0
    %1482 = vdwg.mxu0
    %v1483 = vmax.f32 %v1480, 0.0
    %v1484 = vmul.f32 %v1483, %v1483
    %1485 = vadd.xlane.f32.xlu0 %v1484
    %v1486 = vpop.xlane.xlu0 %1485
    %v1487 = vmul.f32 %v1486, 0.0078125
    %v1488 = vmul.f32 %v1484, %v1484
    %1489 = vadd.xlane.f32.xlu0 %v1488
    %v1490 = vpop.xlane.xlu0 %1489
    %v1491 = vmul.f32 %v1490, 0.0078125
    %v1492 = vmul.f32 %v1487, %v1487
    %v1493 = vsub.f32 %v1491, %v1492
    %v1494 = vsub.f32 %v1484, %v1487
    %v1495 = vadd.f32 %v1493, 1e-05
    %v1496 = vrsqrt.pop %v1495
    %v1497 = vmul.f32 %v1494, %v1496
    %v1498 = vld [vmem:[#allocation4 + $0x1c] sm:$0x1]
    %v1499 = vlaneseq
    %v1500 = vshrl.u32 %v1499, 7
    %v1501 = vsub.s32 0, %v1500
    %v1502 = vrot.slane %v1498, %v1501
    %v1503 = vmul.f32 %v1497, %v1502
    %v1504 = vld [vmem:[#allocation2 + $0x680] sm:$0xff]
    %v1505 = vld [vmem:[#allocation2 + $0x688] sm:$0xff]
    %v1506 = vld [vmem:[#allocation2 + $0x690] sm:$0xff]
    %v1507 = vld [vmem:[#allocation2 + $0x698] sm:$0xff]
    %v1508 = vld [vmem:[#allocation2 + $0x6a0] sm:$0xff]
    %v1509 = vld [vmem:[#allocation2 + $0x6a8] sm:$0xff]
    %v1510 = vld [vmem:[#allocation2 + $0x6b0] sm:$0xff]
    %v1511 = vld [vmem:[#allocation2 + $0x6b8] sm:$0xff]
    %v1512 = vld [vmem:[#allocation2 + $0x6c0] sm:$0xff]
    %v1513 = vld [vmem:[#allocation2 + $0x6c8] sm:$0xff]
    %v1514 = vld [vmem:[#allocation2 + $0x6d0] sm:$0xff]
    %v1515 = vld [vmem:[#allocation2 + $0x6d8] sm:$0xff]
    %v1516 = vld [vmem:[#allocation2 + $0x6e0] sm:$0xff]
    %v1517 = vld [vmem:[#allocation2 + $0x6e8] sm:$0xff]
    %v1518 = vld [vmem:[#allocation2 + $0x6f0] sm:$0xff]
    %v1519 = vld [vmem:[#allocation2 + $0x6f8] sm:$0xff]
    %v1520 = vld [vmem:[#allocation4 + $0x1d] sm:$0x1]
    %v1521 = vlaneseq
    %v1522 = vshrl.u32 %v1521, 7
    %v1523 = vsub.s32 0, %v1522
    %v1524 = vrot.slane %v1520, %v1523
    %1525 = vmatprep.subr.mxu0 0.0
    %1526 = vmatpush1.msra.mxu0 %v1504
    %1527 = vmatprep.subr.mxu0 0.0
    %1528 = vmatpush1.msra.mxu0 %v1505
    %1529 = vmatprep.subr.mxu0 0.0
    %1530 = vmatpush1.msra.mxu0 %v1506
    %1531 = vmatprep.subr.mxu0 0.0
    %1532 = vmatpush1.msra.mxu0 %v1507
    %1533 = vmatprep.subr.mxu0 0.0
    %1534 = vmatpush1.msra.mxu0 %v1508
    %1535 = vmatprep.subr.mxu0 0.0
    %1536 = vmatpush1.msra.mxu0 %v1509
    %1537 = vmatprep.subr.mxu0 0.0
    %1538 = vmatpush1.msra.mxu0 %v1510
    %1539 = vmatprep.subr.mxu0 0.0
    %1540 = vmatpush1.msra.mxu0 %v1511
    %1541 = vmatprep.subr.mxu0 0.0
    %1542 = vmatpush1.msra.mxu0 %v1512
    %1543 = vmatprep.subr.mxu0 0.0
    %1544 = vmatpush1.msra.mxu0 %v1513
    %1545 = vmatprep.subr.mxu0 0.0
    %1546 = vmatpush1.msra.mxu0 %v1514
    %1547 = vmatprep.subr.mxu0 0.0
    %1548 = vmatpush1.msra.mxu0 %v1515
    %1549 = vmatprep.subr.mxu0 0.0
    %1550 = vmatpush1.msra.mxu0 %v1516
    %1551 = vmatprep.subr.mxu0 0.0
    %1552 = vmatpush1.msra.mxu0 %v1517
    %1553 = vmatprep.subr.mxu0 0.0
    %1554 = vmatpush1.msra.mxu0 %v1518
    %1555 = vmatprep.subr.mxu0 0.0
    %1556 = vmatpush1.msra.mxu0 %v1519
    %1557 = vmatprep.subr.mxu0 0.0
    %1558 = vmatpush1.msra.mxu0 0.0
    %1559 = vmatprep.subr.mxu0 0.0
    %1560 = vmatpush1.msra.mxu0 0.0
    %1561 = vmatprep.subr.mxu0 0.0
    %1562 = vmatpush1.msra.mxu0 0.0
    %1563 = vmatprep.subr.mxu0 0.0
    %1564 = vmatpush1.msra.mxu0 0.0
    %1565 = vmatprep.subr.mxu0 0.0
    %1566 = vmatpush1.msra.mxu0 0.0
    %1567 = vmatprep.subr.mxu0 0.0
    %1568 = vmatpush1.msra.mxu0 0.0
    %1569 = vmatprep.subr.mxu0 0.0
    %1570 = vmatpush1.msra.mxu0 0.0
    %1571 = vmatprep.subr.mxu0 0.0
    %1572 = vmatpush1.msra.mxu0 0.0
    %1573 = vmatprep.subr.mxu0 0.0
    %1574 = vmatpush1.msra.mxu0 0.0
    %1575 = vmatprep.subr.mxu0 0.0
    %1576 = vmatpush1.msra.mxu0 0.0
    %1577 = vmatprep.subr.mxu0 0.0
    %1578 = vmatpush1.msra.mxu0 0.0
    %1579 = vmatprep.subr.mxu0 0.0
    %1580 = vmatpush1.msra.mxu0 0.0
    %1581 = vmatprep.subr.mxu0 0.0
    %1582 = vmatpush1.msra.mxu0 0.0
    %1583 = vmatprep.subr.mxu0 0.0
    %1584 = vmatpush1.msra.mxu0 0.0
    %1585 = vmatprep.subr.mxu0 0.0
    %1586 = vmatpush1.msra.mxu0 0.0
    %1587 = vmatprep.subr.mxu0 0.0
    %1588 = vmatpush1.msra.mxu0 0.0
    %1589 = vmatprep.mubr.f32.mxu0 0.0
    %1590 = vmatmul.mubr.f32.gmra.mrb[0].mxu0 %v1503
    %v1591 = vpop.f32.mrb[0].mxu0
    %v1592 = vadd.f32 %v1524, %v1591
    %v1593 = vpop.f32.mrb[0].mxu0
    %1594 = vdwg.mxu0
    %1595 = vadd.xlane.f32.xlu0 %v1592
    %v1596 = vpop.xlane.xlu0 %1595
    %v1597 = vmul.f32 %v1596, 0.015625
    %v1598 = vmul.f32 %v1592, %v1592
    %1599 = vadd.xlane.f32.xlu0 %v1598
    %v1600 = vpop.xlane.xlu0 %1599
    %v1601 = vmul.f32 %v1600, 0.015625
    %v1602 = vmul.f32 %v1597, %v1597
    %v1603 = vsub.f32 %v1601, %v1602
    %v1604 = vsub.f32 %v1592, %v1597
    %v1605 = vadd.f32 %v1603, 1e-05
    %v1606 = vrsqrt.pop %v1605
    %v1607 = vmul.f32 %v1604, %v1606
    %v1608 = vld [vmem:[#allocation4 + $0x1e] sm:$0x1]
    %v1609 = vlaneseq
    %v1610 = vshrl.u32 %v1609, 7
    %v1611 = vsub.s32 0, %v1610
    %v1612 = vrot.slane %v1608, %v1611
    %v1613 = vmul.f32 %v1607, %v1612
    %v1614 = vld [vmem:[#allocation4 + $0x1f] sm:$0x1]
    %v1615 = vlaneseq
    %v1616 = vshrl.u32 %v1615, 7
    %v1617 = vsub.s32 0, %v1616
    %v1618 = vrot.slane %v1614, %v1617
    %v1619 = vmul.f32 %v1391, %v1618
    %v1620 = vadd.f32 %v1619, %v1613
    %v1621 = vld [vmem:[#allocation2 + $0x700] sm:$0xff]
    %v1622 = vld [vmem:[#allocation2 + $0x708] sm:$0xff]
    %v1623 = vld [vmem:[#allocation2 + $0x710] sm:$0xff]
    %v1624 = vld [vmem:[#allocation2 + $0x718] sm:$0xff]
    %v1625 = vld [vmem:[#allocation2 + $0x720] sm:$0xff]
    %v1626 = vld [vmem:[#allocation2 + $0x728] sm:$0xff]
    %v1627 = vld [vmem:[#allocation2 + $0x730] sm:$0xff]
    %v1628 = vld [vmem:[#allocation2 + $0x738] sm:$0xff]
    %v1629 = vld [vmem:[#allocation2 + $0x740] sm:$0xff]
    %v1630 = vld [vmem:[#allocation2 + $0x748] sm:$0xff]
    %v1631 = vld [vmem:[#allocation2 + $0x750] sm:$0xff]
    %v1632 = vld [vmem:[#allocation2 + $0x758] sm:$0xff]
    %v1633 = vld [vmem:[#allocation2 + $0x760] sm:$0xff]
    %v1634 = vld [vmem:[#allocation2 + $0x768] sm:$0xff]
    %v1635 = vld [vmem:[#allocation2 + $0x770] sm:$0xff]
    %v1636 = vld [vmem:[#allocation2 + $0x778] sm:$0xff]
    %v1637 = vld [vmem:[#allocation4 + $0x20] sm:$0x1]
    %v1638 = vlaneseq
    %v1639 = vshrl.u32 %v1638, 7
    %v1640 = vsub.s32 0, %v1639
    %v1641 = vrot.slane %v1637, %v1640
    %1642 = vmatprep.subr.mxu0 0.0
    %1643 = vmatpush1.msra.mxu0 %v1621
    %1644 = vmatprep.subr.mxu0 0.0
    %1645 = vmatpush1.msra.mxu0 %v1622
    %1646 = vmatprep.subr.mxu0 0.0
    %1647 = vmatpush1.msra.mxu0 %v1623
    %1648 = vmatprep.subr.mxu0 0.0
    %1649 = vmatpush1.msra.mxu0 %v1624
    %1650 = vmatprep.subr.mxu0 0.0
    %1651 = vmatpush1.msra.mxu0 %v1625
    %1652 = vmatprep.subr.mxu0 0.0
    %1653 = vmatpush1.msra.mxu0 %v1626
    %1654 = vmatprep.subr.mxu0 0.0
    %1655 = vmatpush1.msra.mxu0 %v1627
    %1656 = vmatprep.subr.mxu0 0.0
    %1657 = vmatpush1.msra.mxu0 %v1628
    %1658 = vmatprep.subr.mxu0 0.0
    %1659 = vmatpush1.msra.mxu0 %v1629
    %1660 = vmatprep.subr.mxu0 0.0
    %1661 = vmatpush1.msra.mxu0 %v1630
    %1662 = vmatprep.subr.mxu0 0.0
    %1663 = vmatpush1.msra.mxu0 %v1631
    %1664 = vmatprep.subr.mxu0 0.0
    %1665 = vmatpush1.msra.mxu0 %v1632
    %1666 = vmatprep.subr.mxu0 0.0
    %1667 = vmatpush1.msra.mxu0 %v1633
    %1668 = vmatprep.subr.mxu0 0.0
    %1669 = vmatpush1.msra.mxu0 %v1634
    %1670 = vmatprep.subr.mxu0 0.0
    %1671 = vmatpush1.msra.mxu0 %v1635
    %1672 = vmatprep.subr.mxu0 0.0
    %1673 = vmatpush1.msra.mxu0 %v1636
    %1674 = vmatprep.subr.mxu0 0.0
    %1675 = vmatpush1.msra.mxu0 0.0
    %1676 = vmatprep.subr.mxu0 0.0
    %1677 = vmatpush1.msra.mxu0 0.0
    %1678 = vmatprep.subr.mxu0 0.0
    %1679 = vmatpush1.msra.mxu0 0.0
    %1680 = vmatprep.subr.mxu0 0.0
    %1681 = vmatpush1.msra.mxu0 0.0
    %1682 = vmatprep.subr.mxu0 0.0
    %1683 = vmatpush1.msra.mxu0 0.0
    %1684 = vmatprep.subr.mxu0 0.0
    %1685 = vmatpush1.msra.mxu0 0.0
    %1686 = vmatprep.subr.mxu0 0.0
    %1687 = vmatpush1.msra.mxu0 0.0
    %1688 = vmatprep.subr.mxu0 0.0
    %1689 = vmatpush1.msra.mxu0 0.0
    %1690 = vmatprep.subr.mxu0 0.0
    %1691 = vmatpush1.msra.mxu0 0.0
    %1692 = vmatprep.subr.mxu0 0.0
    %1693 = vmatpush1.msra.mxu0 0.0
    %1694 = vmatprep.subr.mxu0 0.0
    %1695 = vmatpush1.msra.mxu0 0.0
    %1696 = vmatprep.subr.mxu0 0.0
    %1697 = vmatpush1.msra.mxu0 0.0
    %1698 = vmatprep.subr.mxu0 0.0
    %1699 = vmatpush1.msra.mxu0 0.0
    %1700 = vmatprep.subr.mxu0 0.0
    %1701 = vmatpush1.msra.mxu0 0.0
    %1702 = vmatprep.subr.mxu0 0.0
    %1703 = vmatpush1.msra.mxu0 0.0
    %1704 = vmatprep.subr.mxu0 0.0
    %1705 = vmatpush1.msra.mxu0 0.0
    %1706 = vmatprep.mubr.f32.mxu0 0.0
    %1707 = vmatmul.mubr.f32.gmra.mrb[0].mxu0 %v1620
    %v1708 = vpop.f32.mrb[0].mxu0
    %v1709 = vadd.f32 %v1641, %v1708
    %v1710 = vpop.f32.mrb[0].mxu0
    %1711 = vdwg.mxu0
    %vm1712 = vcmp.lt.s32.totalorder %v43, 6
    %v1713 = vsel %vm1712, %v1160, -1e+30
    %1714 = vmax.xlane.f32.xlu0 %v1713
    %v1715 = vpop.xlane.xlu0 %1714
    %v1716 = vsub.f32 %v1713, %v1715
    %v1717 = vmul.f32 %v1716, 1.442695
    %v1718 = vpow.pop %v1717
    %1719 = vadd.xlane.f32.xlu0 %v1718
    %v1720 = vpop.xlane.xlu0 %1719
    %v1721 = vrcp.pop %v1720
    %v1722 = vmul.f32 %v1718, %v1721
    %v1723 = vadd.f32 %v1722, %v1709
    %1724 = vst [vmem:[%s3] sm:$0xff] %v1723
    // Predicated region
    $region22: #{_actor_forward.1} parent=1 // pred_check
      _
    $region23: #{_actor_forward.1} parent=1 // pred_check_branch
      %1726 = sbr.rel (0) target = $region25
    $region24: #{_actor_forward.1} parent=1 // pred_region
      _
    $region25: #{_actor_forward.1} parent=1 // pred_fallthru
      _
    // Predicated region
    $region26: #{_actor_forward.1} parent=1 // pred_check
      _
    $region27: #{_actor_forward.1} parent=1 // pred_check_branch
      %1728 = sbr.rel (0) target = $region29
    $region28: #{_actor_forward.1} parent=1 // pred_region
      _
    $region29: #{_actor_forward.1} parent=1 // pred_fallthru
      _
    %1729 = vsyncpa [#allocation3], 1
    %1730 = vsyncpa [#allocation5], 1

</llo_original>
